<compile_context>
chip_gen: v5e
topology: v5e:2x2
jax: 0.10.0
libtpu: 0.0.40
codegen_flags: <defaults>
</compile_context>

<pallas_src>
import math
from functools import partial

import jax
import jax.numpy as jnp
from jax.experimental import pallas as pl
from jax.experimental.pallas import tpu as pltpu


def _layernorm(v, g, b, eps=1e-5):
    mu = jnp.mean(v, axis=-1, keepdims=True)
    var = jnp.mean((v - mu) ** 2, axis=-1, keepdims=True)
    return (v - mu) * jax.lax.rsqrt(var + eps) * g + b


def transformer_block_kernel(
    x_ref,       # (B*S, D)  flattened activations
    vecs_ref,    # (6, D)    [ln1_g, ln1_b, ln2_g, ln2_b, bo, bpr]
    wqkv_ref,    # (D, 3D)   fused QKV weight
    bqkv_ref,    # (1, 3D)   fused QKV bias
    wo_ref,      # (H, d_head, D) head-major output projection
    wfc_ref,     # (D, d_mlp)
    bfc_ref,     # (1, d_mlp)
    wpr_ref,     # (d_mlp, D)
    o_ref,       # (B*S, D)
    attn_scratch,  # VMEM scratch (B*S, D) f32
    *, batch, seq, n_heads, d_head, compute_dtype,
):
    f32 = jnp.float32
    d_model = n_heads * d_head

    x = x_ref[...].astype(f32)                       # (BS, D)

    ln1_g = vecs_ref[0:1, :]
    ln1_b = vecs_ref[1:2, :]
    ln2_g = vecs_ref[2:3, :]
    ln2_b = vecs_ref[3:4, :]
    bo    = vecs_ref[4:5, :]
    bpr   = vecs_ref[5:6, :]

    # ---- LN1 + fused QKV projection (single GEMM over all B*S rows) ----
    h = _layernorm(x, ln1_g, ln1_b)
    qkv = jnp.dot(h.astype(compute_dtype), wqkv_ref[...].astype(compute_dtype),
                  preferred_element_type=f32) + bqkv_ref[...]          # (BS, 3D)
    qkv_c = qkv.astype(compute_dtype)                                  # cast once

    scale = 1.0 / math.sqrt(d_head)

    # ---- attention: batch loop only around the (S,S) score/softmax/PV block ----
    for b in range(batch):
        r0 = b * seq
        qkv_b = qkv_c[r0:r0 + seq, :]                                  # (S, 3D)
        acc = None
        for hd in range(n_heads):                                      # small static unroll
            c0 = hd * d_head
            # fold 1/sqrt(d_head) onto q (cheaper than scaling the (S,S) scores)
            q_h = qkv_b[:, c0:c0 + d_head] * jnp.asarray(scale, compute_dtype)
            k_h = qkv_b[:, d_model + c0: d_model + c0 + d_head]
            v_h = qkv_b[:, 2 * d_model + c0: 2 * d_model + c0 + d_head]
            s = jnp.einsum("qd,kd->qk", q_h, k_h,
                           preferred_element_type=f32)                 # (S, S)
            s = s - jnp.max(s, axis=-1, keepdims=True)
            p = jnp.exp(s)
            p = p * pl.reciprocal(jnp.sum(p, axis=-1, keepdims=True), approx=True)
            z_h = jnp.dot(p.astype(compute_dtype), v_h,
                          preferred_element_type=f32)                  # (S, d_head)
            # head-major output projection, accumulated (no lane concat)
            contrib = jnp.dot(z_h.astype(compute_dtype),
                              wo_ref[hd].astype(compute_dtype),
                              preferred_element_type=f32)              # (S, D)
            acc = contrib if acc is None else acc + contrib
        attn_scratch[r0:r0 + seq, :] = acc

    # residual 1 (score_drop / drop1 are identity at p=0.0)
    x = x + attn_scratch[...] + bo

    # ---- LN2 + MLP (quickGELU) + residual 2 (h_fc / drop2 identity) ----
    h2 = _layernorm(x, ln2_g, ln2_b)
    hfc = jnp.dot(h2.astype(compute_dtype), wfc_ref[...].astype(compute_dtype),
                  preferred_element_type=f32) + bfc_ref[...]           # (BS, d_mlp)
    acts = hfc * jax.nn.sigmoid(1.702 * hfc)                           # quick_gelu
    mlp = jnp.dot(acts.astype(compute_dtype), wpr_ref[...].astype(compute_dtype),
                  preferred_element_type=f32) + bpr                    # (BS, D)

    o_ref[...] = (x + mlp).astype(o_ref.dtype)


def transformer_block(x, params, *, n_heads, d_head, compute_dtype=jnp.float32):
    """x: (B, S, D). Weights stored (in, out); biases (1, out)."""
    B, S, D = x.shape
    BS = B * S

    # --- wrapper-side packing (free in XLA, fewer / larger kernel inputs) ---
    w_qkv = jnp.concatenate([params["wq"], params["wk"], params["wv"]], axis=1)  # (D, 3D)
    b_qkv = jnp.concatenate([params["bq"], params["bk"], params["bv"]], axis=1)  # (1, 3D)
    wo_heads = params["wo"].reshape(n_heads, d_head, D)                          # (H, dh, D)
    vecs = jnp.concatenate([params["ln1_g"], params["ln1_b"],
                            params["ln2_g"], params["ln2_b"],
                            params["bo"], params["bpr"]], axis=0)                # (6, D)
    x_flat = x.reshape(BS, D)

    kernel = partial(transformer_block_kernel, batch=B, seq=S,
                     n_heads=n_heads, d_head=d_head, compute_dtype=compute_dtype)

    vmem = pl.BlockSpec(memory_space=pltpu.MemorySpace.VMEM)
    out_flat = pl.pallas_call(
        kernel,
        out_shape=jax.ShapeDtypeStruct((BS, D), x.dtype),
        in_specs=[vmem] * 8,
        out_specs=vmem,
        scratch_shapes=[pltpu.VMEM((BS, D), jnp.float32)],
        # TODO(synk): for realistic ViT sizes (D=768, d_mlp=3072, long seq) tile
        # the row dim and the MLP hidden dim with a grid + accumulator and set
        # vmem_limit_bytes (v7x has only 64 MiB VMEM); at these demo shapes
        # everything fits comfortably in a single VMEM-resident slab.
    )(x_flat, vecs, w_qkv, b_qkv, wo_heads,
      params["wfc"], params["bfc"], params["wpr"])
    return out_flat.reshape(B, S, D)


# ---- pure-JAX reference (same math as the PyTorch module, dropout=0) ----
def reference_block(x, p, *, n_heads, d_head):
    def ln(v, g, b):
        mu = v.mean(-1, keepdims=True)
        var = ((v - mu) ** 2).mean(-1, keepdims=True)
        return (v - mu) / jnp.sqrt(var + 1e-5) * g[0] + b[0]

    B, S, D = x.shape
    h = ln(x, p["ln1_g"], p["ln1_b"])
    q = h @ p["wq"] + p["bq"][0]
    k = h @ p["wk"] + p["bk"][0]
    v = h @ p["wv"] + p["bv"][0]
    q = q.reshape(B, S, n_heads, d_head)
    k = k.reshape(B, S, n_heads, d_head)
    v = v.reshape(B, S, n_heads, d_head)
    attn = jnp.einsum("bqhd,bkhd->bhqk", q, k) / math.sqrt(d_head)
    sc = jax.nn.softmax(attn, axis=-1)
    z = jnp.einsum("bhqk,bkhd->bqhd", sc, v).reshape(B, S, D)
    x = x + (z @ p["wo"] + p["bo"][0])
    h2 = ln(x, p["ln2_g"], p["ln2_b"])
    hfc = h2 @ p["wfc"] + p["bfc"][0]
    acts = hfc * jax.nn.sigmoid(1.702 * hfc)
    x = x + (acts @ p["wpr"] + p["bpr"][0])
    return x


if __name__ == "__main__":
    # Small ViT config: image_res=(16,16), patch_size=4 -> 4x4 patches + CLS = seq 17
    d_model = 32
    n_heads = 4
    d_head = d_model // n_heads
    mlp_mult = 4
    d_mlp = d_model * mlp_mult
    batch = 2
    seq = (16 // 4) * (16 // 4) + 1  # 17

    key = jax.random.PRNGKey(0)
    keys = jax.random.split(key, 12)
    scale = 0.02

    # Linear weights stored as (in, out); PyTorch nn.Linear would be (out, in) with x @ W.T.
    params = {
        "ln1_g": jnp.ones((1, d_model), jnp.float32),
        "ln1_b": jnp.zeros((1, d_model), jnp.float32),
        "wq": scale * jax.random.normal(keys[0], (d_model, d_model), jnp.float32),
        "bq": scale * jax.random.normal(keys[1], (1, d_model), jnp.float32),
        "wk": scale * jax.random.normal(keys[2], (d_model, d_model), jnp.float32),
        "bk": scale * jax.random.normal(keys[3], (1, d_model), jnp.float32),
        "wv": scale * jax.random.normal(keys[4], (d_model, d_model), jnp.float32),
        "bv": scale * jax.random.normal(keys[5], (1, d_model), jnp.float32),
        "wo": scale * jax.random.normal(keys[6], (d_model, d_model), jnp.float32),
        "bo": scale * jax.random.normal(keys[7], (1, d_model), jnp.float32),
        "ln2_g": jnp.ones((1, d_model), jnp.float32),
        "ln2_b": jnp.zeros((1, d_model), jnp.float32),
        "wfc": scale * jax.random.normal(keys[8], (d_model, d_mlp), jnp.float32),
        "bfc": scale * jax.random.normal(keys[9], (1, d_mlp), jnp.float32),
        "wpr": scale * jax.random.normal(keys[10], (d_mlp, d_model), jnp.float32),
        "bpr": scale * jax.random.normal(keys[11], (1, d_model), jnp.float32),
    }

    x = jax.random.normal(jax.random.PRNGKey(42), (batch, seq, d_model), jnp.float32)

    out = transformer_block(x, params, n_heads=n_heads, d_head=d_head)
    out = jax.block_until_ready(out)

    ref = reference_block(x, params, n_heads=n_heads, d_head=d_head)
    assert out.shape == (batch, seq, d_model)
    max_err = float(jnp.max(jnp.abs(out - ref)))
    # approx reciprocal in the softmax introduces a tiny extra error vs. exact divide
    assert jnp.allclose(out, ref, atol=1e-3, rtol=1e-3), max_err

    print("KERNEL_OK")
</pallas_src>

<mosaic_0001>
module attributes {stable_mosaic.version = 11 : i64} {
  func.func @transformer_block_kernel(%arg0: memref<34x32xf32, #tpu.memory_space<vmem>>, %arg1: memref<6x32xf32, #tpu.memory_space<vmem>>, %arg2: memref<32x96xf32, #tpu.memory_space<vmem>>, %arg3: memref<1x96xf32, #tpu.memory_space<vmem>>, %arg4: memref<4x8x32xf32, #tpu.memory_space<vmem>>, %arg5: memref<32x128xf32, #tpu.memory_space<vmem>>, %arg6: memref<1x128xf32, #tpu.memory_space<vmem>>, %arg7: memref<128x32xf32, #tpu.memory_space<vmem>>, %arg8: memref<34x32xf32, #tpu.memory_space<vmem>>, %arg9: memref<34x32xf32, #tpu.memory_space<vmem>>) attributes {dimension_semantics = [], scalar_prefetch = 0 : i64, scratch_operands = 1 : i64, tpu.core_type = #tpu.core_type<tc>} {
    %c0 = arith.constant 0 : index
    %c0_0 = arith.constant 0 : index
    %0 = vector.load %arg0[%c0, %c0_0] : memref<34x32xf32, #tpu.memory_space<vmem>>, vector<34x32xf32>
    %c0_1 = arith.constant 0 : index
    %c0_2 = arith.constant 0 : index
    %1 = vector.load %arg1[%c0_1, %c0_2] : memref<6x32xf32, #tpu.memory_space<vmem>>, vector<1x32xf32>
    %c1 = arith.constant 1 : index
    %c0_3 = arith.constant 0 : index
    %2 = vector.load %arg1[%c1, %c0_3] : memref<6x32xf32, #tpu.memory_space<vmem>>, vector<1x32xf32>
    %c2 = arith.constant 2 : index
    %c0_4 = arith.constant 0 : index
    %3 = vector.load %arg1[%c2, %c0_4] : memref<6x32xf32, #tpu.memory_space<vmem>>, vector<1x32xf32>
    %c3 = arith.constant 3 : index
    %c0_5 = arith.constant 0 : index
    %4 = vector.load %arg1[%c3, %c0_5] : memref<6x32xf32, #tpu.memory_space<vmem>>, vector<1x32xf32>
    %c4 = arith.constant 4 : index
    %c0_6 = arith.constant 0 : index
    %5 = vector.load %arg1[%c4, %c0_6] : memref<6x32xf32, #tpu.memory_space<vmem>>, vector<1x32xf32>
    %c5 = arith.constant 5 : index
    %c0_7 = arith.constant 0 : index
    %6 = vector.load %arg1[%c5, %c0_7] : memref<6x32xf32, #tpu.memory_space<vmem>>, vector<1x32xf32>
    %cst = arith.constant dense<0.000000e+00> : vector<34xf32>
    %7 = vector.multi_reduction <add>, %0, %cst [1] : vector<34x32xf32> to vector<34xf32>
    %8 = vector.shape_cast %7 : vector<34xf32> to vector<34x1xf32>
    %cst_8 = arith.constant 3.200000e+01 : f32
    %9 = vector.broadcast %cst_8 : f32 to vector<34x1xf32>
    %10 = arith.divf %8, %9 : vector<34x1xf32>
    %11 = vector.broadcast %10 : vector<34x1xf32> to vector<34x32xf32>
    %12 = arith.subf %0, %11 : vector<34x32xf32>
    %13 = arith.mulf %12, %12 : vector<34x32xf32>
    %cst_9 = arith.constant dense<0.000000e+00> : vector<34xf32>
    %14 = vector.multi_reduction <add>, %13, %cst_9 [1] : vector<34x32xf32> to vector<34xf32>
    %15 = vector.shape_cast %14 : vector<34xf32> to vector<34x1xf32>
    %cst_10 = arith.constant 3.200000e+01 : f32
    %16 = vector.broadcast %cst_10 : f32 to vector<34x1xf32>
    %17 = arith.divf %15, %16 : vector<34x1xf32>
    %18 = vector.broadcast %10 : vector<34x1xf32> to vector<34x32xf32>
    %19 = arith.subf %0, %18 : vector<34x32xf32>
    %cst_11 = arith.constant 9.99999974E-6 : f32
    %20 = vector.broadcast %cst_11 : f32 to vector<34x1xf32>
    %21 = arith.addf %17, %20 : vector<34x1xf32>
    %22 = math.rsqrt %21 : vector<34x1xf32>
    %23 = vector.broadcast %22 : vector<34x1xf32> to vector<34x32xf32>
    %24 = arith.mulf %19, %23 : vector<34x32xf32>
    %25 = vector.broadcast %1 : vector<1x32xf32> to vector<34x32xf32>
    %26 = arith.mulf %24, %25 : vector<34x32xf32>
    %27 = vector.broadcast %2 : vector<1x32xf32> to vector<34x32xf32>
    %28 = arith.addf %26, %27 : vector<34x32xf32>
    %c0_12 = arith.constant 0 : index
    %c0_13 = arith.constant 0 : index
    %29 = vector.load %arg2[%c0_12, %c0_13] : memref<32x96xf32, #tpu.memory_space<vmem>>, vector<32x96xf32>
    %cst_14 = arith.constant dense<0.000000e+00> : vector<34x96xf32>
    %30 = tpu.matmul %28, %29, %cst_14 {dimension_numbers = #tpu.dot_dimension_numbers<[1], [0], [0], [1], [0, 0, 1, 1], [], []>} : vector<34x32xf32>, vector<32x96xf32>, vector<34x96xf32> -> vector<34x96xf32>
    %c0_15 = arith.constant 0 : index
    %c0_16 = arith.constant 0 : index
    %31 = vector.load %arg3[%c0_15, %c0_16] : memref<1x96xf32, #tpu.memory_space<vmem>>, vector<1x96xf32>
    %32 = vector.broadcast %31 : vector<1x96xf32> to vector<34x96xf32>
    %33 = arith.addf %30, %32 : vector<34x96xf32>
    %34 = vector.extract_strided_slice %33 {offsets = [0, 0], sizes = [17, 96], strides = [1, 1]} : vector<34x96xf32> to vector<17x96xf32>
    %35 = vector.extract_strided_slice %34 {offsets = [0, 0], sizes = [17, 8], strides = [1, 1]} : vector<17x96xf32> to vector<17x8xf32>
    %cst_17 = arith.constant 0.353553385 : f32
    %36 = vector.broadcast %cst_17 : f32 to vector<17x8xf32>
    %37 = arith.mulf %35, %36 : vector<17x8xf32>
    %38 = vector.extract_strided_slice %34 {offsets = [0, 32], sizes = [17, 8], strides = [1, 1]} : vector<17x96xf32> to vector<17x8xf32>
    %39 = vector.extract_strided_slice %34 {offsets = [0, 64], sizes = [17, 8], strides = [1, 1]} : vector<17x96xf32> to vector<17x8xf32>
    "tpu.trace_start"() <{level = 10 : i32, message = "qd,kd->qk"}> : () -> ()
    %cst_18 = arith.constant dense<0.000000e+00> : vector<17x17xf32>
    %40 = tpu.matmul %37, %38, %cst_18 {dimension_numbers = #tpu.dot_dimension_numbers<[1], [1], [0], [0], [0, 0, 1, 0], [], []>} : vector<17x8xf32>, vector<17x8xf32>, vector<17x17xf32> -> vector<17x17xf32>
    "tpu.trace_stop"() : () -> ()
    %cst_19 = arith.constant dense<0xFF800000> : vector<17xf32>
    %41 = vector.multi_reduction <maximumf>, %40, %cst_19 [1] : vector<17x17xf32> to vector<17xf32>
    %42 = vector.shape_cast %41 : vector<17xf32> to vector<17x1xf32>
    %43 = vector.broadcast %42 : vector<17x1xf32> to vector<17x17xf32>
    %44 = arith.subf %40, %43 : vector<17x17xf32>
    %45 = math.exp %44 : vector<17x17xf32>
    %cst_20 = arith.constant dense<0.000000e+00> : vector<17xf32>
    %46 = vector.multi_reduction <add>, %45, %cst_20 [1] : vector<17x17xf32> to vector<17xf32>
    %47 = vector.shape_cast %46 : vector<17xf32> to vector<17x1xf32>
    %48 = tpu.reciprocal %47 {approx = true} : vector<17x1xf32> -> vector<17x1xf32>
    %49 = vector.broadcast %48 : vector<17x1xf32> to vector<17x17xf32>
    %50 = arith.mulf %45, %49 : vector<17x17xf32>
    %cst_21 = arith.constant dense<0.000000e+00> : vector<17x8xf32>
    %51 = tpu.matmul %50, %39, %cst_21 {dimension_numbers = #tpu.dot_dimension_numbers<[1], [0], [0], [1], [0, 0, 1, 1], [], []>} : vector<17x17xf32>, vector<17x8xf32>, vector<17x8xf32> -> vector<17x8xf32>
    %c0_22 = arith.constant 0 : index
    %c0_23 = arith.constant 0 : index
    %c0_24 = arith.constant 0 : index
    %52 = vector.load %arg4[%c0_22, %c0_23, %c0_24] : memref<4x8x32xf32, #tpu.memory_space<vmem>>, vector<1x8x32xf32>
    %53 = vector.shape_cast %52 : vector<1x8x32xf32> to vector<8x32xf32>
    %cst_25 = arith.constant dense<0.000000e+00> : vector<17x32xf32>
    %54 = tpu.matmul %51, %53, %cst_25 {dimension_numbers = #tpu.dot_dimension_numbers<[1], [0], [0], [1], [0, 0, 1, 1], [], []>} : vector<17x8xf32>, vector<8x32xf32>, vector<17x32xf32> -> vector<17x32xf32>
    %55 = vector.extract_strided_slice %34 {offsets = [0, 8], sizes = [17, 8], strides = [1, 1]} : vector<17x96xf32> to vector<17x8xf32>
    %cst_26 = arith.constant 0.353553385 : f32
    %56 = vector.broadcast %cst_26 : f32 to vector<17x8xf32>
    %57 = arith.mulf %55, %56 : vector<17x8xf32>
    %58 = vector.extract_strided_slice %34 {offsets = [0, 40], sizes = [17, 8], strides = [1, 1]} : vector<17x96xf32> to vector<17x8xf32>
    %59 = vector.extract_strided_slice %34 {offsets = [0, 72], sizes = [17, 8], strides = [1, 1]} : vector<17x96xf32> to vector<17x8xf32>
    "tpu.trace_start"() <{level = 10 : i32, message = "qd,kd->qk"}> : () -> ()
    %cst_27 = arith.constant dense<0.000000e+00> : vector<17x17xf32>
    %60 = tpu.matmul %57, %58, %cst_27 {dimension_numbers = #tpu.dot_dimension_numbers<[1], [1], [0], [0], [0, 0, 1, 0], [], []>} : vector<17x8xf32>, vector<17x8xf32>, vector<17x17xf32> -> vector<17x17xf32>
    "tpu.trace_stop"() : () -> ()
    %cst_28 = arith.constant dense<0xFF800000> : vector<17xf32>
    %61 = vector.multi_reduction <maximumf>, %60, %cst_28 [1] : vector<17x17xf32> to vector<17xf32>
    %62 = vector.shape_cast %61 : vector<17xf32> to vector<17x1xf32>
    %63 = vector.broadcast %62 : vector<17x1xf32> to vector<17x17xf32>
    %64 = arith.subf %60, %63 : vector<17x17xf32>
    %65 = math.exp %64 : vector<17x17xf32>
    %cst_29 = arith.constant dense<0.000000e+00> : vector<17xf32>
    %66 = vector.multi_reduction <add>, %65, %cst_29 [1] : vector<17x17xf32> to vector<17xf32>
    %67 = vector.shape_cast %66 : vector<17xf32> to vector<17x1xf32>
    %68 = tpu.reciprocal %67 {approx = true} : vector<17x1xf32> -> vector<17x1xf32>
    %69 = vector.broadcast %68 : vector<17x1xf32> to vector<17x17xf32>
    %70 = arith.mulf %65, %69 : vector<17x17xf32>
    %cst_30 = arith.constant dense<0.000000e+00> : vector<17x8xf32>
    %71 = tpu.matmul %70, %59, %cst_30 {dimension_numbers = #tpu.dot_dimension_numbers<[1], [0], [0], [1], [0, 0, 1, 1], [], []>} : vector<17x17xf32>, vector<17x8xf32>, vector<17x8xf32> -> vector<17x8xf32>
    %c1_31 = arith.constant 1 : index
    %c0_32 = arith.constant 0 : index
    %c0_33 = arith.constant 0 : index
    %72 = vector.load %arg4[%c1_31, %c0_32, %c0_33] : memref<4x8x32xf32, #tpu.memory_space<vmem>>, vector<1x8x32xf32>
    %73 = vector.shape_cast %72 : vector<1x8x32xf32> to vector<8x32xf32>
    %cst_34 = arith.constant dense<0.000000e+00> : vector<17x32xf32>
    %74 = tpu.matmul %71, %73, %cst_34 {dimension_numbers = #tpu.dot_dimension_numbers<[1], [0], [0], [1], [0, 0, 1, 1], [], []>} : vector<17x8xf32>, vector<8x32xf32>, vector<17x32xf32> -> vector<17x32xf32>
    %75 = arith.addf %54, %74 : vector<17x32xf32>
    %76 = vector.extract_strided_slice %34 {offsets = [0, 16], sizes = [17, 8], strides = [1, 1]} : vector<17x96xf32> to vector<17x8xf32>
    %cst_35 = arith.constant 0.353553385 : f32
    %77 = vector.broadcast %cst_35 : f32 to vector<17x8xf32>
    %78 = arith.mulf %76, %77 : vector<17x8xf32>
    %79 = vector.extract_strided_slice %34 {offsets = [0, 48], sizes = [17, 8], strides = [1, 1]} : vector<17x96xf32> to vector<17x8xf32>
    %80 = vector.extract_strided_slice %34 {offsets = [0, 80], sizes = [17, 8], strides = [1, 1]} : vector<17x96xf32> to vector<17x8xf32>
    "tpu.trace_start"() <{level = 10 : i32, message = "qd,kd->qk"}> : () -> ()
    %cst_36 = arith.constant dense<0.000000e+00> : vector<17x17xf32>
    %81 = tpu.matmul %78, %79, %cst_36 {dimension_numbers = #tpu.dot_dimension_numbers<[1], [1], [0], [0], [0, 0, 1, 0], [], []>} : vector<17x8xf32>, vector<17x8xf32>, vector<17x17xf32> -> vector<17x17xf32>
    "tpu.trace_stop"() : () -> ()
    %cst_37 = arith.constant dense<0xFF800000> : vector<17xf32>
    %82 = vector.multi_reduction <maximumf>, %81, %cst_37 [1] : vector<17x17xf32> to vector<17xf32>
    %83 = vector.shape_cast %82 : vector<17xf32> to vector<17x1xf32>
    %84 = vector.broadcast %83 : vector<17x1xf32> to vector<17x17xf32>
    %85 = arith.subf %81, %84 : vector<17x17xf32>
    %86 = math.exp %85 : vector<17x17xf32>
    %cst_38 = arith.constant dense<0.000000e+00> : vector<17xf32>
    %87 = vector.multi_reduction <add>, %86, %cst_38 [1] : vector<17x17xf32> to vector<17xf32>
    %88 = vector.shape_cast %87 : vector<17xf32> to vector<17x1xf32>
    %89 = tpu.reciprocal %88 {approx = true} : vector<17x1xf32> -> vector<17x1xf32>
    %90 = vector.broadcast %89 : vector<17x1xf32> to vector<17x17xf32>
    %91 = arith.mulf %86, %90 : vector<17x17xf32>
    %cst_39 = arith.constant dense<0.000000e+00> : vector<17x8xf32>
    %92 = tpu.matmul %91, %80, %cst_39 {dimension_numbers = #tpu.dot_dimension_numbers<[1], [0], [0], [1], [0, 0, 1, 1], [], []>} : vector<17x17xf32>, vector<17x8xf32>, vector<17x8xf32> -> vector<17x8xf32>
    %c2_40 = arith.constant 2 : index
    %c0_41 = arith.constant 0 : index
    %c0_42 = arith.constant 0 : index
    %93 = vector.load %arg4[%c2_40, %c0_41, %c0_42] : memref<4x8x32xf32, #tpu.memory_space<vmem>>, vector<1x8x32xf32>
    %94 = vector.shape_cast %93 : vector<1x8x32xf32> to vector<8x32xf32>
    %cst_43 = arith.constant dense<0.000000e+00> : vector<17x32xf32>
    %95 = tpu.matmul %92, %94, %cst_43 {dimension_numbers = #tpu.dot_dimension_numbers<[1], [0], [0], [1], [0, 0, 1, 1], [], []>} : vector<17x8xf32>, vector<8x32xf32>, vector<17x32xf32> -> vector<17x32xf32>
    %96 = arith.addf %75, %95 : vector<17x32xf32>
    %97 = vector.extract_strided_slice %34 {offsets = [0, 24], sizes = [17, 8], strides = [1, 1]} : vector<17x96xf32> to vector<17x8xf32>
    %cst_44 = arith.constant 0.353553385 : f32
    %98 = vector.broadcast %cst_44 : f32 to vector<17x8xf32>
    %99 = arith.mulf %97, %98 : vector<17x8xf32>
    %100 = vector.extract_strided_slice %34 {offsets = [0, 56], sizes = [17, 8], strides = [1, 1]} : vector<17x96xf32> to vector<17x8xf32>
    %101 = vector.extract_strided_slice %34 {offsets = [0, 88], sizes = [17, 8], strides = [1, 1]} : vector<17x96xf32> to vector<17x8xf32>
    "tpu.trace_start"() <{level = 10 : i32, message = "qd,kd->qk"}> : () -> ()
    %cst_45 = arith.constant dense<0.000000e+00> : vector<17x17xf32>
    %102 = tpu.matmul %99, %100, %cst_45 {dimension_numbers = #tpu.dot_dimension_numbers<[1], [1], [0], [0], [0, 0, 1, 0], [], []>} : vector<17x8xf32>, vector<17x8xf32>, vector<17x17xf32> -> vector<17x17xf32>
    "tpu.trace_stop"() : () -> ()
    %cst_46 = arith.constant dense<0xFF800000> : vector<17xf32>
    %103 = vector.multi_reduction <maximumf>, %102, %cst_46 [1] : vector<17x17xf32> to vector<17xf32>
    %104 = vector.shape_cast %103 : vector<17xf32> to vector<17x1xf32>
    %105 = vector.broadcast %104 : vector<17x1xf32> to vector<17x17xf32>
    %106 = arith.subf %102, %105 : vector<17x17xf32>
    %107 = math.exp %106 : vector<17x17xf32>
    %cst_47 = arith.constant dense<0.000000e+00> : vector<17xf32>
    %108 = vector.multi_reduction <add>, %107, %cst_47 [1] : vector<17x17xf32> to vector<17xf32>
    %109 = vector.shape_cast %108 : vector<17xf32> to vector<17x1xf32>
    %110 = tpu.reciprocal %109 {approx = true} : vector<17x1xf32> -> vector<17x1xf32>
    %111 = vector.broadcast %110 : vector<17x1xf32> to vector<17x17xf32>
    %112 = arith.mulf %107, %111 : vector<17x17xf32>
    %cst_48 = arith.constant dense<0.000000e+00> : vector<17x8xf32>
    %113 = tpu.matmul %112, %101, %cst_48 {dimension_numbers = #tpu.dot_dimension_numbers<[1], [0], [0], [1], [0, 0, 1, 1], [], []>} : vector<17x17xf32>, vector<17x8xf32>, vector<17x8xf32> -> vector<17x8xf32>
    %c3_49 = arith.constant 3 : index
    %c0_50 = arith.constant 0 : index
    %c0_51 = arith.constant 0 : index
    %114 = vector.load %arg4[%c3_49, %c0_50, %c0_51] : memref<4x8x32xf32, #tpu.memory_space<vmem>>, vector<1x8x32xf32>
    %115 = vector.shape_cast %114 : vector<1x8x32xf32> to vector<8x32xf32>
    %cst_52 = arith.constant dense<0.000000e+00> : vector<17x32xf32>
    %116 = tpu.matmul %113, %115, %cst_52 {dimension_numbers = #tpu.dot_dimension_numbers<[1], [0], [0], [1], [0, 0, 1, 1], [], []>} : vector<17x8xf32>, vector<8x32xf32>, vector<17x32xf32> -> vector<17x32xf32>
    %117 = arith.addf %96, %116 : vector<17x32xf32>
    %c0_53 = arith.constant 0 : index
    %c0_54 = arith.constant 0 : index
    %118 = vector.load %arg9[%c0_53, %c0_54] : memref<34x32xf32, #tpu.memory_space<vmem>>, vector<17x32xf32>
    tpu.vector_store %arg9[%c0_53, %c0_54], %117 {strides = array<i32>} : memref<34x32xf32, #tpu.memory_space<vmem>>, vector<17x32xf32>,
    %119 = vector.extract_strided_slice %33 {offsets = [17, 0], sizes = [17, 96], strides = [1, 1]} : vector<34x96xf32> to vector<17x96xf32>
    %120 = vector.extract_strided_slice %119 {offsets = [0, 0], sizes = [17, 8], strides = [1, 1]} : vector<17x96xf32> to vector<17x8xf32>
    %cst_55 = arith.constant 0.353553385 : f32
    %121 = vector.broadcast %cst_55 : f32 to vector<17x8xf32>
    %122 = arith.mulf %120, %121 : vector<17x8xf32>
    %123 = vector.extract_strided_slice %119 {offsets = [0, 32], sizes = [17, 8], strides = [1, 1]} : vector<17x96xf32> to vector<17x8xf32>
    %124 = vector.extract_strided_slice %119 {offsets = [0, 64], sizes = [17, 8], strides = [1, 1]} : vector<17x96xf32> to vector<17x8xf32>
    "tpu.trace_start"() <{level = 10 : i32, message = "qd,kd->qk"}> : () -> ()
    %cst_56 = arith.constant dense<0.000000e+00> : vector<17x17xf32>
    %125 = tpu.matmul %122, %123, %cst_56 {dimension_numbers = #tpu.dot_dimension_numbers<[1], [1], [0], [0], [0, 0, 1, 0], [], []>} : vector<17x8xf32>, vector<17x8xf32>, vector<17x17xf32> -> vector<17x17xf32>
    "tpu.trace_stop"() : () -> ()
    %cst_57 = arith.constant dense<0xFF800000> : vector<17xf32>
    %126 = vector.multi_reduction <maximumf>, %125, %cst_57 [1] : vector<17x17xf32> to vector<17xf32>
    %127 = vector.shape_cast %126 : vector<17xf32> to vector<17x1xf32>
    %128 = vector.broadcast %127 : vector<17x1xf32> to vector<17x17xf32>
    %129 = arith.subf %125, %128 : vector<17x17xf32>
    %130 = math.exp %129 : vector<17x17xf32>
    %cst_58 = arith.constant dense<0.000000e+00> : vector<17xf32>
    %131 = vector.multi_reduction <add>, %130, %cst_58 [1] : vector<17x17xf32> to vector<17xf32>
    %132 = vector.shape_cast %131 : vector<17xf32> to vector<17x1xf32>
    %133 = tpu.reciprocal %132 {approx = true} : vector<17x1xf32> -> vector<17x1xf32>
    %134 = vector.broadcast %133 : vector<17x1xf32> to vector<17x17xf32>
    %135 = arith.mulf %130, %134 : vector<17x17xf32>
    %cst_59 = arith.constant dense<0.000000e+00> : vector<17x8xf32>
    %136 = tpu.matmul %135, %124, %cst_59 {dimension_numbers = #tpu.dot_dimension_numbers<[1], [0], [0], [1], [0, 0, 1, 1], [], []>} : vector<17x17xf32>, vector<17x8xf32>, vector<17x8xf32> -> vector<17x8xf32>
    %c0_60 = arith.constant 0 : index
    %c0_61 = arith.constant 0 : index
    %c0_62 = arith.constant 0 : index
    %137 = vector.load %arg4[%c0_60, %c0_61, %c0_62] : memref<4x8x32xf32, #tpu.memory_space<vmem>>, vector<1x8x32xf32>
    %138 = vector.shape_cast %137 : vector<1x8x32xf32> to vector<8x32xf32>
    %cst_63 = arith.constant dense<0.000000e+00> : vector<17x32xf32>
    %139 = tpu.matmul %136, %138, %cst_63 {dimension_numbers = #tpu.dot_dimension_numbers<[1], [0], [0], [1], [0, 0, 1, 1], [], []>} : vector<17x8xf32>, vector<8x32xf32>, vector<17x32xf32> -> vector<17x32xf32>
    %140 = vector.extract_strided_slice %119 {offsets = [0, 8], sizes = [17, 8], strides = [1, 1]} : vector<17x96xf32> to vector<17x8xf32>
    %cst_64 = arith.constant 0.353553385 : f32
    %141 = vector.broadcast %cst_64 : f32 to vector<17x8xf32>
    %142 = arith.mulf %140, %141 : vector<17x8xf32>
    %143 = vector.extract_strided_slice %119 {offsets = [0, 40], sizes = [17, 8], strides = [1, 1]} : vector<17x96xf32> to vector<17x8xf32>
    %144 = vector.extract_strided_slice %119 {offsets = [0, 72], sizes = [17, 8], strides = [1, 1]} : vector<17x96xf32> to vector<17x8xf32>
    "tpu.trace_start"() <{level = 10 : i32, message = "qd,kd->qk"}> : () -> ()
    %cst_65 = arith.constant dense<0.000000e+00> : vector<17x17xf32>
    %145 = tpu.matmul %142, %143, %cst_65 {dimension_numbers = #tpu.dot_dimension_numbers<[1], [1], [0], [0], [0, 0, 1, 0], [], []>} : vector<17x8xf32>, vector<17x8xf32>, vector<17x17xf32> -> vector<17x17xf32>
    "tpu.trace_stop"() : () -> ()
    %cst_66 = arith.constant dense<0xFF800000> : vector<17xf32>
    %146 = vector.multi_reduction <maximumf>, %145, %cst_66 [1] : vector<17x17xf32> to vector<17xf32>
    %147 = vector.shape_cast %146 : vector<17xf32> to vector<17x1xf32>
    %148 = vector.broadcast %147 : vector<17x1xf32> to vector<17x17xf32>
    %149 = arith.subf %145, %148 : vector<17x17xf32>
    %150 = math.exp %149 : vector<17x17xf32>
    %cst_67 = arith.constant dense<0.000000e+00> : vector<17xf32>
    %151 = vector.multi_reduction <add>, %150, %cst_67 [1] : vector<17x17xf32> to vector<17xf32>
    %152 = vector.shape_cast %151 : vector<17xf32> to vector<17x1xf32>
    %153 = tpu.reciprocal %152 {approx = true} : vector<17x1xf32> -> vector<17x1xf32>
    %154 = vector.broadcast %153 : vector<17x1xf32> to vector<17x17xf32>
    %155 = arith.mulf %150, %154 : vector<17x17xf32>
    %cst_68 = arith.constant dense<0.000000e+00> : vector<17x8xf32>
    %156 = tpu.matmul %155, %144, %cst_68 {dimension_numbers = #tpu.dot_dimension_numbers<[1], [0], [0], [1], [0, 0, 1, 1], [], []>} : vector<17x17xf32>, vector<17x8xf32>, vector<17x8xf32> -> vector<17x8xf32>
    %c1_69 = arith.constant 1 : index
    %c0_70 = arith.constant 0 : index
    %c0_71 = arith.constant 0 : index
    %157 = vector.load %arg4[%c1_69, %c0_70, %c0_71] : memref<4x8x32xf32, #tpu.memory_space<vmem>>, vector<1x8x32xf32>
    %158 = vector.shape_cast %157 : vector<1x8x32xf32> to vector<8x32xf32>
    %cst_72 = arith.constant dense<0.000000e+00> : vector<17x32xf32>
    %159 = tpu.matmul %156, %158, %cst_72 {dimension_numbers = #tpu.dot_dimension_numbers<[1], [0], [0], [1], [0, 0, 1, 1], [], []>} : vector<17x8xf32>, vector<8x32xf32>, vector<17x32xf32> -> vector<17x32xf32>
    %160 = arith.addf %139, %159 : vector<17x32xf32>
    %161 = vector.extract_strided_slice %119 {offsets = [0, 16], sizes = [17, 8], strides = [1, 1]} : vector<17x96xf32> to vector<17x8xf32>
    %cst_73 = arith.constant 0.353553385 : f32
    %162 = vector.broadcast %cst_73 : f32 to vector<17x8xf32>
    %163 = arith.mulf %161, %162 : vector<17x8xf32>
    %164 = vector.extract_strided_slice %119 {offsets = [0, 48], sizes = [17, 8], strides = [1, 1]} : vector<17x96xf32> to vector<17x8xf32>
    %165 = vector.extract_strided_slice %119 {offsets = [0, 80], sizes = [17, 8], strides = [1, 1]} : vector<17x96xf32> to vector<17x8xf32>
    "tpu.trace_start"() <{level = 10 : i32, message = "qd,kd->qk"}> : () -> ()
    %cst_74 = arith.constant dense<0.000000e+00> : vector<17x17xf32>
    %166 = tpu.matmul %163, %164, %cst_74 {dimension_numbers = #tpu.dot_dimension_numbers<[1], [1], [0], [0], [0, 0, 1, 0], [], []>} : vector<17x8xf32>, vector<17x8xf32>, vector<17x17xf32> -> vector<17x17xf32>
    "tpu.trace_stop"() : () -> ()
    %cst_75 = arith.constant dense<0xFF800000> : vector<17xf32>
    %167 = vector.multi_reduction <maximumf>, %166, %cst_75 [1] : vector<17x17xf32> to vector<17xf32>
    %168 = vector.shape_cast %167 : vector<17xf32> to vector<17x1xf32>
    %169 = vector.broadcast %168 : vector<17x1xf32> to vector<17x17xf32>
    %170 = arith.subf %166, %169 : vector<17x17xf32>
    %171 = math.exp %170 : vector<17x17xf32>
    %cst_76 = arith.constant dense<0.000000e+00> : vector<17xf32>
    %172 = vector.multi_reduction <add>, %171, %cst_76 [1] : vector<17x17xf32> to vector<17xf32>
    %173 = vector.shape_cast %172 : vector<17xf32> to vector<17x1xf32>
    %174 = tpu.reciprocal %173 {approx = true} : vector<17x1xf32> -> vector<17x1xf32>
    %175 = vector.broadcast %174 : vector<17x1xf32> to vector<17x17xf32>
    %176 = arith.mulf %171, %175 : vector<17x17xf32>
    %cst_77 = arith.constant dense<0.000000e+00> : vector<17x8xf32>
    %177 = tpu.matmul %176, %165, %cst_77 {dimension_numbers = #tpu.dot_dimension_numbers<[1], [0], [0], [1], [0, 0, 1, 1], [], []>} : vector<17x17xf32>, vector<17x8xf32>, vector<17x8xf32> -> vector<17x8xf32>
    %c2_78 = arith.constant 2 : index
    %c0_79 = arith.constant 0 : index
    %c0_80 = arith.constant 0 : index
    %178 = vector.load %arg4[%c2_78, %c0_79, %c0_80] : memref<4x8x32xf32, #tpu.memory_space<vmem>>, vector<1x8x32xf32>
    %179 = vector.shape_cast %178 : vector<1x8x32xf32> to vector<8x32xf32>
    %cst_81 = arith.constant dense<0.000000e+00> : vector<17x32xf32>
    %180 = tpu.matmul %177, %179, %cst_81 {dimension_numbers = #tpu.dot_dimension_numbers<[1], [0], [0], [1], [0, 0, 1, 1], [], []>} : vector<17x8xf32>, vector<8x32xf32>, vector<17x32xf32> -> vector<17x32xf32>
    %181 = arith.addf %160, %180 : vector<17x32xf32>
    %182 = vector.extract_strided_slice %119 {offsets = [0, 24], sizes = [17, 8], strides = [1, 1]} : vector<17x96xf32> to vector<17x8xf32>
    %cst_82 = arith.constant 0.353553385 : f32
    %183 = vector.broadcast %cst_82 : f32 to vector<17x8xf32>
    %184 = arith.mulf %182, %183 : vector<17x8xf32>
    %185 = vector.extract_strided_slice %119 {offsets = [0, 56], sizes = [17, 8], strides = [1, 1]} : vector<17x96xf32> to vector<17x8xf32>
    %186 = vector.extract_strided_slice %119 {offsets = [0, 88], sizes = [17, 8], strides = [1, 1]} : vector<17x96xf32> to vector<17x8xf32>
    "tpu.trace_start"() <{level = 10 : i32, message = "qd,kd->qk"}> : () -> ()
    %cst_83 = arith.constant dense<0.000000e+00> : vector<17x17xf32>
    %187 = tpu.matmul %184, %185, %cst_83 {dimension_numbers = #tpu.dot_dimension_numbers<[1], [1], [0], [0], [0, 0, 1, 0], [], []>} : vector<17x8xf32>, vector<17x8xf32>, vector<17x17xf32> -> vector<17x17xf32>
    "tpu.trace_stop"() : () -> ()
    %cst_84 = arith.constant dense<0xFF800000> : vector<17xf32>
    %188 = vector.multi_reduction <maximumf>, %187, %cst_84 [1] : vector<17x17xf32> to vector<17xf32>
    %189 = vector.shape_cast %188 : vector<17xf32> to vector<17x1xf32>
    %190 = vector.broadcast %189 : vector<17x1xf32> to vector<17x17xf32>
    %191 = arith.subf %187, %190 : vector<17x17xf32>
    %192 = math.exp %191 : vector<17x17xf32>
    %cst_85 = arith.constant dense<0.000000e+00> : vector<17xf32>
    %193 = vector.multi_reduction <add>, %192, %cst_85 [1] : vector<17x17xf32> to vector<17xf32>
    %194 = vector.shape_cast %193 : vector<17xf32> to vector<17x1xf32>
    %195 = tpu.reciprocal %194 {approx = true} : vector<17x1xf32> -> vector<17x1xf32>
    %196 = vector.broadcast %195 : vector<17x1xf32> to vector<17x17xf32>
    %197 = arith.mulf %192, %196 : vector<17x17xf32>
    %cst_86 = arith.constant dense<0.000000e+00> : vector<17x8xf32>
    %198 = tpu.matmul %197, %186, %cst_86 {dimension_numbers = #tpu.dot_dimension_numbers<[1], [0], [0], [1], [0, 0, 1, 1], [], []>} : vector<17x17xf32>, vector<17x8xf32>, vector<17x8xf32> -> vector<17x8xf32>
    %c3_87 = arith.constant 3 : index
    %c0_88 = arith.constant 0 : index
    %c0_89 = arith.constant 0 : index
    %199 = vector.load %arg4[%c3_87, %c0_88, %c0_89] : memref<4x8x32xf32, #tpu.memory_space<vmem>>, vector<1x8x32xf32>
    %200 = vector.shape_cast %199 : vector<1x8x32xf32> to vector<8x32xf32>
    %cst_90 = arith.constant dense<0.000000e+00> : vector<17x32xf32>
    %201 = tpu.matmul %198, %200, %cst_90 {dimension_numbers = #tpu.dot_dimension_numbers<[1], [0], [0], [1], [0, 0, 1, 1], [], []>} : vector<17x8xf32>, vector<8x32xf32>, vector<17x32xf32> -> vector<17x32xf32>
    %202 = arith.addf %181, %201 : vector<17x32xf32>
    %c17 = arith.constant 17 : index
    %c0_91 = arith.constant 0 : index
    %203 = vector.load %arg9[%c17, %c0_91] : memref<34x32xf32, #tpu.memory_space<vmem>>, vector<17x32xf32>
    tpu.vector_store %arg9[%c17, %c0_91], %202 {strides = array<i32>} : memref<34x32xf32, #tpu.memory_space<vmem>>, vector<17x32xf32>,
    %c0_92 = arith.constant 0 : index
    %c0_93 = arith.constant 0 : index
    %204 = vector.load %arg9[%c0_92, %c0_93] : memref<34x32xf32, #tpu.memory_space<vmem>>, vector<34x32xf32>
    %205 = arith.addf %0, %204 : vector<34x32xf32>
    %206 = vector.broadcast %5 : vector<1x32xf32> to vector<34x32xf32>
    %207 = arith.addf %205, %206 : vector<34x32xf32>
    %cst_94 = arith.constant dense<0.000000e+00> : vector<34xf32>
    %208 = vector.multi_reduction <add>, %207, %cst_94 [1] : vector<34x32xf32> to vector<34xf32>
    %209 = vector.shape_cast %208 : vector<34xf32> to vector<34x1xf32>
    %cst_95 = arith.constant 3.200000e+01 : f32
    %210 = vector.broadcast %cst_95 : f32 to vector<34x1xf32>
    %211 = arith.divf %209, %210 : vector<34x1xf32>
    %212 = vector.broadcast %211 : vector<34x1xf32> to vector<34x32xf32>
    %213 = arith.subf %207, %212 : vector<34x32xf32>
    %214 = arith.mulf %213, %213 : vector<34x32xf32>
    %cst_96 = arith.constant dense<0.000000e+00> : vector<34xf32>
    %215 = vector.multi_reduction <add>, %214, %cst_96 [1] : vector<34x32xf32> to vector<34xf32>
    %216 = vector.shape_cast %215 : vector<34xf32> to vector<34x1xf32>
    %cst_97 = arith.constant 3.200000e+01 : f32
    %217 = vector.broadcast %cst_97 : f32 to vector<34x1xf32>
    %218 = arith.divf %216, %217 : vector<34x1xf32>
    %219 = vector.broadcast %211 : vector<34x1xf32> to vector<34x32xf32>
    %220 = arith.subf %207, %219 : vector<34x32xf32>
    %cst_98 = arith.constant 9.99999974E-6 : f32
    %221 = vector.broadcast %cst_98 : f32 to vector<34x1xf32>
    %222 = arith.addf %218, %221 : vector<34x1xf32>
    %223 = math.rsqrt %222 : vector<34x1xf32>
    %224 = vector.broadcast %223 : vector<34x1xf32> to vector<34x32xf32>
    %225 = arith.mulf %220, %224 : vector<34x32xf32>
    %226 = vector.broadcast %3 : vector<1x32xf32> to vector<34x32xf32>
    %227 = arith.mulf %225, %226 : vector<34x32xf32>
    %228 = vector.broadcast %4 : vector<1x32xf32> to vector<34x32xf32>
    %229 = arith.addf %227, %228 : vector<34x32xf32>
    %c0_99 = arith.constant 0 : index
    %c0_100 = arith.constant 0 : index
    %230 = vector.load %arg5[%c0_99, %c0_100] : memref<32x128xf32, #tpu.memory_space<vmem>>, vector<32x128xf32>
    %cst_101 = arith.constant dense<0.000000e+00> : vector<34x128xf32>
    %231 = tpu.matmul %229, %230, %cst_101 {dimension_numbers = #tpu.dot_dimension_numbers<[1], [0], [0], [1], [0, 0, 1, 1], [], []>} : vector<34x32xf32>, vector<32x128xf32>, vector<34x128xf32> -> vector<34x128xf32>
    %c0_102 = arith.constant 0 : index
    %c0_103 = arith.constant 0 : index
    %232 = vector.load %arg6[%c0_102, %c0_103] : memref<1x128xf32, #tpu.memory_space<vmem>>, vector<1x128xf32>
    %233 = vector.broadcast %232 : vector<1x128xf32> to vector<34x128xf32>
    %234 = arith.addf %231, %233 : vector<34x128xf32>
    %cst_104 = arith.constant 1.702000e+00 : f32
    %235 = vector.broadcast %cst_104 : f32 to vector<34x128xf32>
    %236 = arith.mulf %235, %234 : vector<34x128xf32>
    %237 = arith.negf %236 : vector<34x128xf32>
    %238 = math.exp %237 : vector<34x128xf32>
    %cst_105 = arith.constant 1.000000e+00 : f32
    %239 = vector.broadcast %cst_105 : f32 to vector<34x128xf32>
    %240 = arith.addf %239, %238 : vector<34x128xf32>
    %241 = arith.divf %239, %240 : vector<34x128xf32>
    %242 = arith.mulf %234, %241 : vector<34x128xf32>
    %c0_106 = arith.constant 0 : index
    %c0_107 = arith.constant 0 : index
    %243 = vector.load %arg7[%c0_106, %c0_107] : memref<128x32xf32, #tpu.memory_space<vmem>>, vector<128x32xf32>
    %cst_108 = arith.constant dense<0.000000e+00> : vector<34x32xf32>
    %244 = tpu.matmul %242, %243, %cst_108 {dimension_numbers = #tpu.dot_dimension_numbers<[1], [0], [0], [1], [0, 0, 1, 1], [], []>} : vector<34x128xf32>, vector<128x32xf32>, vector<34x32xf32> -> vector<34x32xf32>
    %245 = vector.broadcast %6 : vector<1x32xf32> to vector<34x32xf32>
    %246 = arith.addf %244, %245 : vector<34x32xf32>
    %247 = arith.addf %207, %246 : vector<34x32xf32>
    %c0_109 = arith.constant 0 : index
    %c0_110 = arith.constant 0 : index
    %248 = vector.load %arg8[%c0_109, %c0_110] : memref<34x32xf32, #tpu.memory_space<vmem>>, vector<34x32xf32>
    tpu.vector_store %arg8[%c0_109, %c0_110], %247 {strides = array<i32>} : memref<34x32xf32, #tpu.memory_space<vmem>>, vector<34x32xf32>,
    return
  }
}

</mosaic_0001>

<llo_original>
// kernel: tpu_custom_call.1
$region0: #{tpu_custom_call.1}
  #allocation0 [shape = 'u32[]', space=smem, size = 0x4, offset = 0x4, fixed_abs, tag = 'smem constant byte address 0x4 - core index']
  #allocation1 [shape = 'u32[72,128]{1,0:T(1,128)}', space=vmem, size = 0x9000, scoped, tag = 'internal scratch']
  #allocation2 [shape = 'f32[34,32]{1,0:T(8,128)}', space=vmem, size = 0x5000, scoped, tag = 'scratch operand']
  %s0 = inlined_call_operand.vmem [shape: f32[34,32], index: 0, kind: input, shape index: {}]
  %s1 = inlined_call_operand.vmem [shape: f32[6,32], index: 1, kind: input, shape index: {}]
  %s2 = inlined_call_operand.vmem [shape: f32[32,96], index: 2, kind: input, shape index: {}]
  %s3 = inlined_call_operand.vmem [shape: f32[1,96], index: 3, kind: input, shape index: {}]
  %s4 = inlined_call_operand.vmem [shape: f32[4,8,32], index: 4, kind: input, shape index: {}]
  %s5 = inlined_call_operand.vmem [shape: f32[32,128], index: 5, kind: input, shape index: {}]
  %s6 = inlined_call_operand.vmem [shape: f32[1,128], index: 6, kind: input, shape index: {}]
  %s7 = inlined_call_operand.vmem [shape: f32[128,32], index: 7, kind: input, shape index: {}]
  %s8 = inlined_call_operand.vmem [shape: f32[34,32], index: 8, kind: output, shape index: {}]
  %s9 = sld [smem:[#allocation0]]
  $region42: #{tpu_custom_call.1} parent=0
    _
  %s11 = ssub.s32 1, %s9
  %s12 = scalar_select 0, %s11, %s9
  // Predicated region
  $region2: #{tpu_custom_call.1} parent=0 // pred_check
    _
  $region3: #{tpu_custom_call.1} parent=0 // pred_check_branch
    %14 = sbr.rel (0) target = $region5
  $region4: #{tpu_custom_call.1} parent=0 // pred_region
    _
  $region5: #{tpu_custom_call.1} parent=0 // pred_fallthru
    _
  // Predicated region
  $region6: #{tpu_custom_call.1} parent=0 // pred_check
    _
  $region7: #{tpu_custom_call.1} parent=0 // pred_check_branch
    %16 = sbr.rel (0) target = $region9
  $region8: #{tpu_custom_call.1} parent=0 // pred_region
    _
  $region9: #{tpu_custom_call.1} parent=0 // pred_fallthru
    _
  // Predicated region
  $region10: #{tpu_custom_call.1} parent=0 // pred_check
    _
  $region11: #{tpu_custom_call.1} parent=0 // pred_check_branch
    %18 = sbr.rel (0) target = $region13
  $region12: #{tpu_custom_call.1} parent=0 // pred_region
    _
  $region13: #{tpu_custom_call.1} parent=0 // pred_fallthru
    _
  // Predicated region
  $region14: #{tpu_custom_call.1} parent=0 // pred_check
    _
  $region15: #{tpu_custom_call.1} parent=0 // pred_check_branch
    %20 = sbr.rel (0) target = $region17
  $region16: #{tpu_custom_call.1} parent=0 // pred_region
    _
  $region17: #{tpu_custom_call.1} parent=0 // pred_fallthru
    _
  // Predicated region
  $region18: #{tpu_custom_call.1} parent=0 // pred_check
    _
  $region19: #{tpu_custom_call.1} parent=0 // pred_check_branch
    %22 = sbr.rel (0) target = $region21
  $region20: #{tpu_custom_call.1} parent=0 // pred_region
    _
  $region21: #{tpu_custom_call.1} parent=0 // pred_fallthru
    _
  // Predicated region
  $region22: #{tpu_custom_call.1} parent=0 // pred_check
    _
  $region23: #{tpu_custom_call.1} parent=0 // pred_check_branch
    %24 = sbr.rel (0) target = $region25
  $region24: #{tpu_custom_call.1} parent=0 // pred_region
    _
  $region25: #{tpu_custom_call.1} parent=0 // pred_fallthru
    _
  // Predicated region
  $region26: #{tpu_custom_call.1} parent=0 // pred_check
    _
  $region27: #{tpu_custom_call.1} parent=0 // pred_check_branch
    %26 = sbr.rel (0) target = $region29
  $region28: #{tpu_custom_call.1} parent=0 // pred_region
    _
  $region29: #{tpu_custom_call.1} parent=0 // pred_fallthru
    _
  // Predicated region
  $region30: #{tpu_custom_call.1} parent=0 // pred_check
    _
  $region31: #{tpu_custom_call.1} parent=0 // pred_check_branch
    %28 = sbr.rel (0) target = $region33
  $region32: #{tpu_custom_call.1} parent=0 // pred_region
    _
  $region33: #{tpu_custom_call.1} parent=0 // pred_fallthru
    _
  %v29 = vld [vmem:[%s0] sm:$0xff]
  %v30 = vld [vmem:[%s0 + $0x8] sm:$0xff]
  %v31 = vld [vmem:[%s0 + $0x10] sm:$0xff]
  %v32 = vld [vmem:[%s0 + $0x18] sm:$0xff]
  %v33 = vld [vmem:[%s0 + $0x20] sm:$0x3]
  %v34 = vld [vmem:[%s1] sm:$0x1]
  %v35 = vld [vmem:[%s1 + $0x1] sm:$0x1]
  %v36 = vld [vmem:[%s1 + $0x2] sm:$0x1]
  %v37 = vld [vmem:[%s1 + $0x3] sm:$0x1]
  %v38 = vld [vmem:[%s1 + $0x4] sm:$0x1]
  %v39 = vld [vmem:[%s1 + $0x5] sm:$0x1]
  %vm40 = vcmask 261120
  %v41 = vsel %vm40, %v29, 0.0
  %42 = vadd.xlane.f32.xlu0 %v41
  %v43 = vpop.xlane.xlu0 %42
  %v44 = vsel %vm40, %v30, 0.0
  %45 = vadd.xlane.f32.xlu0 %v44
  %v46 = vpop.xlane.xlu0 %45
  %v47 = vsel %vm40, %v31, 0.0
  %48 = vadd.xlane.f32.xlu0 %v47
  %v49 = vpop.xlane.xlu0 %48
  %v50 = vsel %vm40, %v32, 0.0
  %51 = vadd.xlane.f32.xlu0 %v50
  %v52 = vpop.xlane.xlu0 %51
  %vm53 = vcmask 254976
  %v54 = vsel %vm53, %v33, 0.0
  %55 = vadd.xlane.f32.xlu0 %v54
  %v56 = vpop.xlane.xlu0 %55
  %v57 = vrcp.pop 32.0
  %v58 = vmul.f32 32.0, %v57
  %v59 = vsub.f32 1.0, %v58
  %v60 = vmul.f32 %v57, %v59
  %v61 = vadd.f32 %v57, %v60
  %vm62 = vweird.f32 %v57
  %v63 = vsel %vm62, %v57, %v61
  %v64 = vmul.f32 %v43, %v63
  %v65 = vmul.f32 %v46, %v63
  %v66 = vmul.f32 %v49, %v63
  %v67 = vmul.f32 %v52, %v63
  %v68 = vmul.f32 %v56, %v63
  %v69 = vsub.f32 %v29, %v64
  %v70 = vsub.f32 %v30, %v65
  %v71 = vsub.f32 %v31, %v66
  %v72 = vsub.f32 %v32, %v67
  %v73 = vsub.f32 %v33, %v68
  %v74 = vmul.f32 %v69, %v69
  %v75 = vmul.f32 %v70, %v70
  %v76 = vmul.f32 %v71, %v71
  %v77 = vmul.f32 %v72, %v72
  %v78 = vmul.f32 %v73, %v73
  %v79 = vsel %vm40, %v74, 0.0
  %80 = vadd.xlane.f32.xlu0 %v79
  %v81 = vpop.xlane.xlu0 %80
  %v82 = vsel %vm40, %v75, 0.0
  %83 = vadd.xlane.f32.xlu0 %v82
  %v84 = vpop.xlane.xlu0 %83
  %v85 = vsel %vm40, %v76, 0.0
  %86 = vadd.xlane.f32.xlu0 %v85
  %v87 = vpop.xlane.xlu0 %86
  %v88 = vsel %vm40, %v77, 0.0
  %89 = vadd.xlane.f32.xlu0 %v88
  %v90 = vpop.xlane.xlu0 %89
  %v91 = vsel %vm53, %v78, 0.0
  %92 = vadd.xlane.f32.xlu0 %v91
  %v93 = vpop.xlane.xlu0 %92
  %v94 = vmul.f32 %v81, %v63
  %v95 = vmul.f32 %v84, %v63
  %v96 = vmul.f32 %v87, %v63
  %v97 = vmul.f32 %v90, %v63
  %v98 = vmul.f32 %v93, %v63
  %v99 = vadd.f32 %v94, 1e-05
  %v100 = vadd.f32 %v95, 1e-05
  %v101 = vadd.f32 %v96, 1e-05
  %v102 = vadd.f32 %v97, 1e-05
  %v103 = vadd.f32 %v98, 1e-05
  %v104 = vrsqrt.pop %v99
  %v105 = vmul.f32 %v104, %v99
  %v106 = vmul.f32 %v105, %v104
  %v107 = vmul.f32 0.5, %v106
  %v108 = vsub.f32 1.5, %v107
  %v109 = vmul.f32 %v104, %v108
  %vm110 = vweird.f32 %v99
  %vm111 = vweird.f32 %v104
  %vm112 = vmor %vm110, %vm111
  %v113 = vsel %vm112, %v104, %v109
  %v114 = vrsqrt.pop %v100
  %v115 = vmul.f32 %v114, %v100
  %v116 = vmul.f32 %v115, %v114
  %v117 = vmul.f32 0.5, %v116
  %v118 = vsub.f32 1.5, %v117
  %v119 = vmul.f32 %v114, %v118
  %vm120 = vweird.f32 %v100
  %vm121 = vweird.f32 %v114
  %vm122 = vmor %vm120, %vm121
  %v123 = vsel %vm122, %v114, %v119
  %v124 = vrsqrt.pop %v101
  %v125 = vmul.f32 %v124, %v101
  %v126 = vmul.f32 %v125, %v124
  %v127 = vmul.f32 0.5, %v126
  %v128 = vsub.f32 1.5, %v127
  %v129 = vmul.f32 %v124, %v128
  %vm130 = vweird.f32 %v101
  %vm131 = vweird.f32 %v124
  %vm132 = vmor %vm130, %vm131
  %v133 = vsel %vm132, %v124, %v129
  %v134 = vrsqrt.pop %v102
  %v135 = vmul.f32 %v134, %v102
  %v136 = vmul.f32 %v135, %v134
  %v137 = vmul.f32 0.5, %v136
  %v138 = vsub.f32 1.5, %v137
  %v139 = vmul.f32 %v134, %v138
  %vm140 = vweird.f32 %v102
  %vm141 = vweird.f32 %v134
  %vm142 = vmor %vm140, %vm141
  %v143 = vsel %vm142, %v134, %v139
  %v144 = vrsqrt.pop %v103
  %v145 = vmul.f32 %v144, %v103
  %v146 = vmul.f32 %v145, %v144
  %v147 = vmul.f32 0.5, %v146
  %v148 = vsub.f32 1.5, %v147
  %v149 = vmul.f32 %v144, %v148
  %vm150 = vweird.f32 %v103
  %vm151 = vweird.f32 %v144
  %vm152 = vmor %vm150, %vm151
  %v153 = vsel %vm152, %v144, %v149
  %v154 = vmul.f32 %v69, %v113
  %v155 = vmul.f32 %v70, %v123
  %v156 = vmul.f32 %v71, %v133
  %v157 = vmul.f32 %v72, %v143
  %v158 = vmul.f32 %v73, %v153
  %v159 = vperm.slane %v34, 0
  %v160 = vmul.f32 %v154, %v159
  %v161 = vmul.f32 %v155, %v159
  %v162 = vmul.f32 %v156, %v159
  %v163 = vmul.f32 %v157, %v159
  %v164 = vmul.f32 %v158, %v159
  %v165 = vperm.slane %v35, 0
  %v166 = vadd.f32 %v160, %v165
  %v167 = vadd.f32 %v161, %v165
  %v168 = vadd.f32 %v162, %v165
  %v169 = vadd.f32 %v163, %v165
  %v170 = vadd.f32 %v164, %v165
  %v171 = vld [vmem:[%s2] sm:$0xff]
  %v172 = vld [vmem:[%s2 + $0x8] sm:$0xff]
  %v173 = vld [vmem:[%s2 + $0x10] sm:$0xff]
  %v174 = vld [vmem:[%s2 + $0x18] sm:$0xff]
  %v175 = vld [vmem:[%s3] sm:$0x1]
  %v177 = vperm.slane %v175, 0
  %v180 = vsel %vm40, %v166, 0
  %v183 = vsel %vm40, %v167, 0
  %v186 = vsel %vm40, %v168, 0
  %v189 = vsel %vm40, %v169, 0
  %v192 = vsel %vm40, %v170, 0
  %194 = vmatpush.msra.mxu0 0.0
  %195 = vmatpush.msra.mxu0 0.0
  %196 = vmatpush.msra.mxu0 0.0
  %197 = vmatpush.msra.mxu0 0.0
  %198 = vmatpush.msra.mxu0 0.0
  %199 = vmatpush.msra.mxu0 0.0
  %200 = vmatpush.msra.mxu0 0.0
  %201 = vmatpush.msra.mxu0 0.0
  %202 = vmatpush.msra.mxu0 0.0
  %203 = vmatpush.msra.mxu0 0.0
  %204 = vmatpush.msra.mxu0 0.0
  %205 = vmatpush.msra.mxu0 0.0
  %206 = vmatpush.msra.mxu0 %v174
  %207 = vmatpush.msra.mxu0 %v173
  %208 = vmatpush.msra.mxu0 %v172
  %209 = vmatpush.msra.mxu0 %v171
  %210 = vmatmul.f32.gmra.mxu0 %v180
  %v211 = vpop.f32.mrf.mxu0
  %v212 = vadd.f32 %v177, %v211
  %213 = vmatmul.f32.gmra.mxu0 %v183
  %v214 = vpop.f32.mrf.mxu0
  %v215 = vadd.f32 %v177, %v214
  %216 = vmatmul.f32.gmra.mxu0 %v186
  %v217 = vpop.f32.mrf.mxu0
  %v218 = vadd.f32 %v177, %v217
  %219 = vmatmul.f32.gmra.mxu0 %v189
  %v220 = vpop.f32.mrf.mxu0
  %v221 = vadd.f32 %v177, %v220
  %222 = vmatmul.f32.gmra.mxu0 %v192
  %v223 = vpop.f32.mrf.mxu0
  %v224 = vadd.f32 %v177, %v223
  %225 = vdwg.mxu0
  %v226 = vmul.f32 %v212, 0.35355338
  %v227 = vmul.f32 %v215, 0.35355338
  %v228 = vmul.f32 %v218, 0.35355338
  %232 = vrot.lane.b32.xlu0 %v212, 96
  %v233 = vpop.permute.xlu0 %232
  %234 = vrot.lane.b32.xlu0 %v215, 96
  %v235 = vpop.permute.xlu0 %234
  %236 = vrot.lane.b32.xlu0 %v218, 96
  %v237 = vpop.permute.xlu0 %236
  %vm238 = vcmask 64512
  %v240 = vsel %vm238, %v226, 0
  %v243 = vsel %vm238, %v227, 0
  %v246 = vsel %vm238, %v228, 0
  %v248 = vsel %vm238, %v233, 0
  %v250 = vsel %vm238, %v235, 0
  %v252 = vsel %vm238, %v237, 0
  %254 = vmatpush.xpose.msra.mxu0 0.0
  %255 = vmatpush.xpose.msra.mxu0 0.0
  %256 = vmatpush.xpose.msra.mxu0 0.0
  %257 = vmatpush.xpose.msra.mxu0 0.0
  %258 = vmatpush.xpose.msra.mxu0 0.0
  %259 = vmatpush.xpose.msra.mxu0 0.0
  %260 = vmatpush.xpose.msra.mxu0 0.0
  %261 = vmatpush.xpose.msra.mxu0 0.0
  %262 = vmatpush.xpose.msra.mxu0 0.0
  %263 = vmatpush.xpose.msra.mxu0 0.0
  %264 = vmatpush.xpose.msra.mxu0 0.0
  %265 = vmatpush.xpose.msra.mxu0 0.0
  %266 = vmatpush.xpose.msra.mxu0 0.0
  %267 = vmatpush.xpose.msra.mxu0 %v252
  %268 = vmatpush.xpose.msra.mxu0 %v250
  %269 = vmatpush.xpose.msra.mxu0 %v248
  %270 = vmatmul.f32.gmra.mxu0 %v240
  %v271 = vpop.f32.mrf.mxu0
  %v272 = vadd.f32 0.0, %v271
  %273 = vmatmul.f32.gmra.mxu0 %v243
  %v274 = vpop.f32.mrf.mxu0
  %v275 = vadd.f32 0.0, %v274
  %276 = vmatmul.f32.gmra.mxu0 %v246
  %v277 = vpop.f32.mrf.mxu0
  %v278 = vadd.f32 0.0, %v277
  %279 = vdwg.mxu0
  %vm280 = vcmask 138240
  %v281 = vsel %vm280, %v272, -inf
  %282 = vmax.xlane.f32.xlu0 %v281
  %v283 = vpop.xlane.xlu0 %282
  %v284 = vsel %vm280, %v275, -inf
  %285 = vmax.xlane.f32.xlu0 %v284
  %v286 = vpop.xlane.xlu0 %285
  %vm287 = vcmask 131072
  %v288 = vsel %vm287, %v278, -inf
  %289 = vmax.xlane.f32.xlu0 %v288
  %v290 = vpop.xlane.xlu0 %289
  %v291 = vsub.f32 %v272, %v283
  %v292 = vsub.f32 %v275, %v286
  %v293 = vsub.f32 %v278, %v290
  %v294 = vmul.f32 %v291, 1.442695
  %v295 = vpow.pop %v294
  %v296 = vmul.f32 %v292, 1.442695
  %v297 = vpow.pop %v296
  %v298 = vmul.f32 %v293, 1.442695
  %v299 = vpow.pop %v298
  %v300 = vsel %vm280, %v295, 0.0
  %301 = vadd.xlane.f32.xlu0 %v300
  %v302 = vpop.xlane.xlu0 %301
  %v303 = vsel %vm280, %v297, 0.0
  %304 = vadd.xlane.f32.xlu0 %v303
  %v305 = vpop.xlane.xlu0 %304
  %v306 = vsel %vm287, %v299, 0.0
  %307 = vadd.xlane.f32.xlu0 %v306
  %v308 = vpop.xlane.xlu0 %307
  %v309 = vrcp.pop %v302
  %v310 = vrcp.pop %v305
  %v311 = vrcp.pop %v308
  %v312 = vmul.f32 %v295, %v309
  %v313 = vmul.f32 %v297, %v310
  %v314 = vmul.f32 %v299, %v311
  %315 = vrot.lane.b32.xlu0 %v212, 64
  %v316 = vpop.permute.xlu0 %315
  %317 = vrot.lane.b32.xlu0 %v215, 64
  %v318 = vpop.permute.xlu0 %317
  %319 = vrot.lane.b32.xlu0 %v218, 64
  %v320 = vpop.permute.xlu0 %319
  %v324 = vsel %vm280, %v312, 0
  %v327 = vsel %vm280, %v313, 0
  %v330 = vsel %vm280, %v314, 0
  %vm332 = vcmask 1040384
  %v333 = vsel %vm332, %v320, 0
  %335 = vmatpush.msra.mxu0 0.0
  %336 = vmatpush.msra.mxu0 0.0
  %337 = vmatpush.msra.mxu0 0.0
  %338 = vmatpush.msra.mxu0 0.0
  %339 = vmatpush.msra.mxu0 0.0
  %340 = vmatpush.msra.mxu0 0.0
  %341 = vmatpush.msra.mxu0 0.0
  %342 = vmatpush.msra.mxu0 0.0
  %343 = vmatpush.msra.mxu0 0.0
  %344 = vmatpush.msra.mxu0 0.0
  %345 = vmatpush.msra.mxu0 0.0
  %346 = vmatpush.msra.mxu0 0.0
  %347 = vmatpush.msra.mxu0 0.0
  %348 = vmatpush.msra.mxu0 %v333
  %349 = vmatpush.msra.mxu0 %v318
  %350 = vmatpush.msra.mxu0 %v316
  %351 = vmatmul.f32.gmra.mxu0 %v324
  %v352 = vpop.f32.mrf.mxu0
  %v353 = vadd.f32 0.0, %v352
  %354 = vmatmul.f32.gmra.mxu0 %v327
  %v355 = vpop.f32.mrf.mxu0
  %v356 = vadd.f32 0.0, %v355
  %357 = vmatmul.f32.gmra.mxu0 %v330
  %v358 = vpop.f32.mrf.mxu0
  %v359 = vadd.f32 0.0, %v358
  %360 = vdwg.mxu0
  %v361 = vld [vmem:[%s4] sm:$0xff]
  %362 = vrot.lane.b32.xlu0 %v226, 120
  %v363 = vpop.permute.xlu0 %362
  %364 = vrot.lane.b32.xlu0 %v227, 120
  %v365 = vpop.permute.xlu0 %364
  %366 = vrot.lane.b32.xlu0 %v228, 120
  %v367 = vpop.permute.xlu0 %366
  %368 = vrot.lane.b32.xlu0 %v212, 88
  %v369 = vpop.permute.xlu0 %368
  %370 = vrot.lane.b32.xlu0 %v215, 88
  %v371 = vpop.permute.xlu0 %370
  %372 = vrot.lane.b32.xlu0 %v218, 88
  %v373 = vpop.permute.xlu0 %372
  %v374 = vsel %vm238, %v363, 0
  %v376 = vsel %vm238, %v365, 0
  %v378 = vsel %vm238, %v367, 0
  %v380 = vsel %vm238, %v369, 0
  %v382 = vsel %vm238, %v371, 0
  %v384 = vsel %vm238, %v373, 0
  %386 = vmatpush.xpose.msra.mxu0 0.0
  %387 = vmatpush.xpose.msra.mxu0 0.0
  %388 = vmatpush.xpose.msra.mxu0 0.0
  %389 = vmatpush.xpose.msra.mxu0 0.0
  %390 = vmatpush.xpose.msra.mxu0 0.0
  %391 = vmatpush.xpose.msra.mxu0 0.0
  %392 = vmatpush.xpose.msra.mxu0 0.0
  %393 = vmatpush.xpose.msra.mxu0 0.0
  %394 = vmatpush.xpose.msra.mxu0 0.0
  %395 = vmatpush.xpose.msra.mxu0 0.0
  %396 = vmatpush.xpose.msra.mxu0 0.0
  %397 = vmatpush.xpose.msra.mxu0 0.0
  %398 = vmatpush.xpose.msra.mxu0 0.0
  %399 = vmatpush.xpose.msra.mxu0 %v384
  %400 = vmatpush.xpose.msra.mxu0 %v382
  %401 = vmatpush.xpose.msra.mxu0 %v380
  %402 = vmatmul.f32.gmra.mxu0 %v374
  %v403 = vpop.f32.mrf.mxu0
  %v404 = vadd.f32 0.0, %v403
  %405 = vmatmul.f32.gmra.mxu0 %v376
  %v406 = vpop.f32.mrf.mxu0
  %v407 = vadd.f32 0.0, %v406
  %408 = vmatmul.f32.gmra.mxu0 %v378
  %v409 = vpop.f32.mrf.mxu0
  %v410 = vadd.f32 0.0, %v409
  %411 = vdwg.mxu0
  %v412 = vsel %vm280, %v404, -inf
  %413 = vmax.xlane.f32.xlu0 %v412
  %v414 = vpop.xlane.xlu0 %413
  %v415 = vsel %vm280, %v407, -inf
  %416 = vmax.xlane.f32.xlu0 %v415
  %v417 = vpop.xlane.xlu0 %416
  %v418 = vsel %vm287, %v410, -inf
  %419 = vmax.xlane.f32.xlu0 %v418
  %v420 = vpop.xlane.xlu0 %419
  %v421 = vsub.f32 %v404, %v414
  %v422 = vsub.f32 %v407, %v417
  %v423 = vsub.f32 %v410, %v420
  %v424 = vmul.f32 %v421, 1.442695
  %v425 = vpow.pop %v424
  %v426 = vmul.f32 %v422, 1.442695
  %v427 = vpow.pop %v426
  %v428 = vmul.f32 %v423, 1.442695
  %v429 = vpow.pop %v428
  %v430 = vsel %vm280, %v425, 0.0
  %431 = vadd.xlane.f32.xlu0 %v430
  %v432 = vpop.xlane.xlu0 %431
  %v433 = vsel %vm280, %v427, 0.0
  %434 = vadd.xlane.f32.xlu0 %v433
  %v435 = vpop.xlane.xlu0 %434
  %v436 = vsel %vm287, %v429, 0.0
  %437 = vadd.xlane.f32.xlu0 %v436
  %v438 = vpop.xlane.xlu0 %437
  %v439 = vrcp.pop %v432
  %v440 = vrcp.pop %v435
  %v441 = vrcp.pop %v438
  %v442 = vmul.f32 %v425, %v439
  %v443 = vmul.f32 %v427, %v440
  %v444 = vmul.f32 %v429, %v441
  %445 = vrot.lane.b32.xlu0 %v212, 56
  %v446 = vpop.permute.xlu0 %445
  %447 = vrot.lane.b32.xlu0 %v215, 56
  %v448 = vpop.permute.xlu0 %447
  %449 = vrot.lane.b32.xlu0 %v218, 56
  %v450 = vpop.permute.xlu0 %449
  %v454 = vsel %vm280, %v442, 0
  %v457 = vsel %vm280, %v443, 0
  %v460 = vsel %vm280, %v444, 0
  %v462 = vsel %vm332, %v450, 0
  %464 = vmatpush.msra.mxu0 0.0
  %465 = vmatpush.msra.mxu0 0.0
  %466 = vmatpush.msra.mxu0 0.0
  %467 = vmatpush.msra.mxu0 0.0
  %468 = vmatpush.msra.mxu0 0.0
  %469 = vmatpush.msra.mxu0 0.0
  %470 = vmatpush.msra.mxu0 0.0
  %471 = vmatpush.msra.mxu0 0.0
  %472 = vmatpush.msra.mxu0 0.0
  %473 = vmatpush.msra.mxu0 0.0
  %474 = vmatpush.msra.mxu0 0.0
  %475 = vmatpush.msra.mxu0 0.0
  %476 = vmatpush.msra.mxu0 0.0
  %477 = vmatpush.msra.mxu0 %v462
  %478 = vmatpush.msra.mxu0 %v448
  %479 = vmatpush.msra.mxu0 %v446
  %480 = vmatmul.f32.gmra.mxu0 %v454
  %v481 = vpop.f32.mrf.mxu0
  %v482 = vadd.f32 0.0, %v481
  %483 = vmatmul.f32.gmra.mxu0 %v457
  %v484 = vpop.f32.mrf.mxu0
  %v485 = vadd.f32 0.0, %v484
  %486 = vmatmul.f32.gmra.mxu0 %v460
  %v487 = vpop.f32.mrf.mxu0
  %v488 = vadd.f32 0.0, %v487
  %489 = vdwg.mxu0
  %s490 = scalar_lea.vmem %s4, 8
  %v491 = vld [vmem:[%s490] sm:$0xff]
  %v493 = vsel %vm238, %v482, 0
  %v496 = vsel %vm238, %v485, 0
  %v499 = vsel %vm238, %v488, 0
  %501 = vmatpush.msra.mxu0 0.0
  %502 = vmatpush.msra.mxu0 0.0
  %503 = vmatpush.msra.mxu0 0.0
  %504 = vmatpush.msra.mxu0 0.0
  %505 = vmatpush.msra.mxu0 0.0
  %506 = vmatpush.msra.mxu0 0.0
  %507 = vmatpush.msra.mxu0 0.0
  %508 = vmatpush.msra.mxu0 0.0
  %509 = vmatpush.msra.mxu0 0.0
  %510 = vmatpush.msra.mxu0 0.0
  %511 = vmatpush.msra.mxu0 0.0
  %512 = vmatpush.msra.mxu0 0.0
  %513 = vmatpush.msra.mxu0 0.0
  %514 = vmatpush.msra.mxu0 0.0
  %515 = vmatpush.msra.mxu0 0.0
  %516 = vmatpush.msra.mxu0 %v491
  %517 = vmatmul.f32.gmra.mxu0 %v493
  %v518 = vpop.f32.mrf.mxu0
  %v519 = vadd.f32 0.0, %v518
  %520 = vmatmul.f32.gmra.mxu0 %v496
  %v521 = vpop.f32.mrf.mxu0
  %v522 = vadd.f32 0.0, %v521
  %523 = vmatmul.f32.gmra.mxu0 %v499
  %v524 = vpop.f32.mrf.mxu0
  %v525 = vadd.f32 0.0, %v524
  %526 = vdwg.mxu0
  %v528 = vsel %vm238, %v353, 0
  %v531 = vsel %vm238, %v356, 0
  %v534 = vsel %vm238, %v359, 0
  %536 = vmatpush.msra.mxu0 0.0
  %537 = vmatpush.msra.mxu0 0.0
  %538 = vmatpush.msra.mxu0 0.0
  %539 = vmatpush.msra.mxu0 0.0
  %540 = vmatpush.msra.mxu0 0.0
  %541 = vmatpush.msra.mxu0 0.0
  %542 = vmatpush.msra.mxu0 0.0
  %543 = vmatpush.msra.mxu0 0.0
  %544 = vmatpush.msra.mxu0 0.0
  %545 = vmatpush.msra.mxu0 0.0
  %546 = vmatpush.msra.mxu0 0.0
  %547 = vmatpush.msra.mxu0 0.0
  %548 = vmatpush.msra.mxu0 0.0
  %549 = vmatpush.msra.mxu0 0.0
  %550 = vmatpush.msra.mxu0 0.0
  %551 = vmatpush.msra.mxu0 %v361
  %552 = vmatmul.f32.gmra.mxu0 %v528
  %v553 = vpop.f32.mrf.mxu0
  %v554 = vadd.f32 %v519, %v553
  %555 = vmatmul.f32.gmra.mxu0 %v531
  %v556 = vpop.f32.mrf.mxu0
  %v557 = vadd.f32 %v522, %v556
  %558 = vmatmul.f32.gmra.mxu0 %v534
  %v559 = vpop.f32.mrf.mxu0
  %v560 = vadd.f32 %v525, %v559
  %561 = vdwg.mxu0
  %562 = vrot.lane.b32.xlu0 %v226, 112
  %v563 = vpop.permute.xlu0 %562
  %564 = vrot.lane.b32.xlu0 %v227, 112
  %v565 = vpop.permute.xlu0 %564
  %566 = vrot.lane.b32.xlu0 %v228, 112
  %v567 = vpop.permute.xlu0 %566
  %568 = vrot.lane.b32.xlu0 %v212, 80
  %v569 = vpop.permute.xlu0 %568
  %570 = vrot.lane.b32.xlu0 %v215, 80
  %v571 = vpop.permute.xlu0 %570
  %572 = vrot.lane.b32.xlu0 %v218, 80
  %v573 = vpop.permute.xlu0 %572
  %v574 = vsel %vm238, %v563, 0
  %v576 = vsel %vm238, %v565, 0
  %v578 = vsel %vm238, %v567, 0
  %v580 = vsel %vm238, %v569, 0
  %v582 = vsel %vm238, %v571, 0
  %v584 = vsel %vm238, %v573, 0
  %586 = vmatpush.xpose.msra.mxu0 0.0
  %587 = vmatpush.xpose.msra.mxu0 0.0
  %588 = vmatpush.xpose.msra.mxu0 0.0
  %589 = vmatpush.xpose.msra.mxu0 0.0
  %590 = vmatpush.xpose.msra.mxu0 0.0
  %591 = vmatpush.xpose.msra.mxu0 0.0
  %592 = vmatpush.xpose.msra.mxu0 0.0
  %593 = vmatpush.xpose.msra.mxu0 0.0
  %594 = vmatpush.xpose.msra.mxu0 0.0
  %595 = vmatpush.xpose.msra.mxu0 0.0
  %596 = vmatpush.xpose.msra.mxu0 0.0
  %597 = vmatpush.xpose.msra.mxu0 0.0
  %598 = vmatpush.xpose.msra.mxu0 0.0
  %599 = vmatpush.xpose.msra.mxu0 %v584
  %600 = vmatpush.xpose.msra.mxu0 %v582
  %601 = vmatpush.xpose.msra.mxu0 %v580
  %602 = vmatmul.f32.gmra.mxu0 %v574
  %v603 = vpop.f32.mrf.mxu0
  %v604 = vadd.f32 0.0, %v603
  %605 = vmatmul.f32.gmra.mxu0 %v576
  %v606 = vpop.f32.mrf.mxu0
  %v607 = vadd.f32 0.0, %v606
  %608 = vmatmul.f32.gmra.mxu0 %v578
  %v609 = vpop.f32.mrf.mxu0
  %v610 = vadd.f32 0.0, %v609
  %611 = vdwg.mxu0
  %v612 = vsel %vm280, %v604, -inf
  %613 = vmax.xlane.f32.xlu0 %v612
  %v614 = vpop.xlane.xlu0 %613
  %v615 = vsel %vm280, %v607, -inf
  %616 = vmax.xlane.f32.xlu0 %v615
  %v617 = vpop.xlane.xlu0 %616
  %v618 = vsel %vm287, %v610, -inf
  %619 = vmax.xlane.f32.xlu0 %v618
  %v620 = vpop.xlane.xlu0 %619
  %v621 = vsub.f32 %v604, %v614
  %v622 = vsub.f32 %v607, %v617
  %v623 = vsub.f32 %v610, %v620
  %v624 = vmul.f32 %v621, 1.442695
  %v625 = vpow.pop %v624
  %v626 = vmul.f32 %v622, 1.442695
  %v627 = vpow.pop %v626
  %v628 = vmul.f32 %v623, 1.442695
  %v629 = vpow.pop %v628
  %v630 = vsel %vm280, %v625, 0.0
  %631 = vadd.xlane.f32.xlu0 %v630
  %v632 = vpop.xlane.xlu0 %631
  %v633 = vsel %vm280, %v627, 0.0
  %634 = vadd.xlane.f32.xlu0 %v633
  %v635 = vpop.xlane.xlu0 %634
  %v636 = vsel %vm287, %v629, 0.0
  %637 = vadd.xlane.f32.xlu0 %v636
  %v638 = vpop.xlane.xlu0 %637
  %v639 = vrcp.pop %v632
  %v640 = vrcp.pop %v635
  %v641 = vrcp.pop %v638
  %v642 = vmul.f32 %v625, %v639
  %v643 = vmul.f32 %v627, %v640
  %v644 = vmul.f32 %v629, %v641
  %645 = vrot.lane.b32.xlu0 %v212, 48
  %v646 = vpop.permute.xlu0 %645
  %647 = vrot.lane.b32.xlu0 %v215, 48
  %v648 = vpop.permute.xlu0 %647
  %649 = vrot.lane.b32.xlu0 %v218, 48
  %v650 = vpop.permute.xlu0 %649
  %v654 = vsel %vm280, %v642, 0
  %v657 = vsel %vm280, %v643, 0
  %v660 = vsel %vm280, %v644, 0
  %v662 = vsel %vm332, %v650, 0
  %664 = vmatpush.msra.mxu0 0.0
  %665 = vmatpush.msra.mxu0 0.0
  %666 = vmatpush.msra.mxu0 0.0
  %667 = vmatpush.msra.mxu0 0.0
  %668 = vmatpush.msra.mxu0 0.0
  %669 = vmatpush.msra.mxu0 0.0
  %670 = vmatpush.msra.mxu0 0.0
  %671 = vmatpush.msra.mxu0 0.0
  %672 = vmatpush.msra.mxu0 0.0
  %673 = vmatpush.msra.mxu0 0.0
  %674 = vmatpush.msra.mxu0 0.0
  %675 = vmatpush.msra.mxu0 0.0
  %676 = vmatpush.msra.mxu0 0.0
  %677 = vmatpush.msra.mxu0 %v662
  %678 = vmatpush.msra.mxu0 %v648
  %679 = vmatpush.msra.mxu0 %v646
  %680 = vmatmul.f32.gmra.mxu0 %v654
  %v681 = vpop.f32.mrf.mxu0
  %v682 = vadd.f32 0.0, %v681
  %683 = vmatmul.f32.gmra.mxu0 %v657
  %v684 = vpop.f32.mrf.mxu0
  %v685 = vadd.f32 0.0, %v684
  %686 = vmatmul.f32.gmra.mxu0 %v660
  %v687 = vpop.f32.mrf.mxu0
  %v688 = vadd.f32 0.0, %v687
  %689 = vdwg.mxu0
  %s690 = scalar_lea.vmem %s4, 16
  %v691 = vld [vmem:[%s690] sm:$0xff]
  %v693 = vsel %vm238, %v682, 0
  %v696 = vsel %vm238, %v685, 0
  %v699 = vsel %vm238, %v688, 0
  %701 = vmatpush.msra.mxu0 0.0
  %702 = vmatpush.msra.mxu0 0.0
  %703 = vmatpush.msra.mxu0 0.0
  %704 = vmatpush.msra.mxu0 0.0
  %705 = vmatpush.msra.mxu0 0.0
  %706 = vmatpush.msra.mxu0 0.0
  %707 = vmatpush.msra.mxu0 0.0
  %708 = vmatpush.msra.mxu0 0.0
  %709 = vmatpush.msra.mxu0 0.0
  %710 = vmatpush.msra.mxu0 0.0
  %711 = vmatpush.msra.mxu0 0.0
  %712 = vmatpush.msra.mxu0 0.0
  %713 = vmatpush.msra.mxu0 0.0
  %714 = vmatpush.msra.mxu0 0.0
  %715 = vmatpush.msra.mxu0 0.0
  %716 = vmatpush.msra.mxu0 %v691
  %717 = vmatmul.f32.gmra.mxu0 %v693
  %v718 = vpop.f32.mrf.mxu0
  %v719 = vadd.f32 0.0, %v718
  %720 = vmatmul.f32.gmra.mxu0 %v696
  %v721 = vpop.f32.mrf.mxu0
  %v722 = vadd.f32 0.0, %v721
  %723 = vmatmul.f32.gmra.mxu0 %v699
  %v724 = vpop.f32.mrf.mxu0
  %v725 = vadd.f32 0.0, %v724
  %726 = vdwg.mxu0
  %v727 = vadd.f32 %v554, %v719
  %v728 = vadd.f32 %v557, %v722
  %v729 = vadd.f32 %v560, %v725
  %730 = vrot.lane.b32.xlu0 %v226, 104
  %v731 = vpop.permute.xlu0 %730
  %732 = vrot.lane.b32.xlu0 %v227, 104
  %v733 = vpop.permute.xlu0 %732
  %734 = vrot.lane.b32.xlu0 %v228, 104
  %v735 = vpop.permute.xlu0 %734
  %736 = vrot.lane.b32.xlu0 %v212, 72
  %v737 = vpop.permute.xlu0 %736
  %738 = vrot.lane.b32.xlu0 %v215, 72
  %v739 = vpop.permute.xlu0 %738
  %740 = vrot.lane.b32.xlu0 %v218, 72
  %v741 = vpop.permute.xlu0 %740
  %v742 = vsel %vm238, %v731, 0
  %v744 = vsel %vm238, %v733, 0
  %v746 = vsel %vm238, %v735, 0
  %v748 = vsel %vm238, %v737, 0
  %v750 = vsel %vm238, %v739, 0
  %v752 = vsel %vm238, %v741, 0
  %754 = vmatpush.xpose.msra.mxu0 0.0
  %755 = vmatpush.xpose.msra.mxu0 0.0
  %756 = vmatpush.xpose.msra.mxu0 0.0
  %757 = vmatpush.xpose.msra.mxu0 0.0
  %758 = vmatpush.xpose.msra.mxu0 0.0
  %759 = vmatpush.xpose.msra.mxu0 0.0
  %760 = vmatpush.xpose.msra.mxu0 0.0
  %761 = vmatpush.xpose.msra.mxu0 0.0
  %762 = vmatpush.xpose.msra.mxu0 0.0
  %763 = vmatpush.xpose.msra.mxu0 0.0
  %764 = vmatpush.xpose.msra.mxu0 0.0
  %765 = vmatpush.xpose.msra.mxu0 0.0
  %766 = vmatpush.xpose.msra.mxu0 0.0
  %767 = vmatpush.xpose.msra.mxu0 %v752
  %768 = vmatpush.xpose.msra.mxu0 %v750
  %769 = vmatpush.xpose.msra.mxu0 %v748
  %770 = vmatmul.f32.gmra.mxu0 %v742
  %v771 = vpop.f32.mrf.mxu0
  %v772 = vadd.f32 0.0, %v771
  %773 = vmatmul.f32.gmra.mxu0 %v744
  %v774 = vpop.f32.mrf.mxu0
  %v775 = vadd.f32 0.0, %v774
  %776 = vmatmul.f32.gmra.mxu0 %v746
  %v777 = vpop.f32.mrf.mxu0
  %v778 = vadd.f32 0.0, %v777
  %779 = vdwg.mxu0
  %v780 = vsel %vm280, %v772, -inf
  %781 = vmax.xlane.f32.xlu0 %v780
  %v782 = vpop.xlane.xlu0 %781
  %v783 = vsel %vm280, %v775, -inf
  %784 = vmax.xlane.f32.xlu0 %v783
  %v785 = vpop.xlane.xlu0 %784
  %v786 = vsel %vm287, %v778, -inf
  %787 = vmax.xlane.f32.xlu0 %v786
  %v788 = vpop.xlane.xlu0 %787
  %v789 = vsub.f32 %v772, %v782
  %v790 = vsub.f32 %v775, %v785
  %v791 = vsub.f32 %v778, %v788
  %v792 = vmul.f32 %v789, 1.442695
  %v793 = vpow.pop %v792
  %v794 = vmul.f32 %v790, 1.442695
  %v795 = vpow.pop %v794
  %v796 = vmul.f32 %v791, 1.442695
  %v797 = vpow.pop %v796
  %v798 = vsel %vm280, %v793, 0.0
  %799 = vadd.xlane.f32.xlu0 %v798
  %v800 = vpop.xlane.xlu0 %799
  %v801 = vsel %vm280, %v795, 0.0
  %802 = vadd.xlane.f32.xlu0 %v801
  %v803 = vpop.xlane.xlu0 %802
  %v804 = vsel %vm287, %v797, 0.0
  %805 = vadd.xlane.f32.xlu0 %v804
  %v806 = vpop.xlane.xlu0 %805
  %v807 = vrcp.pop %v800
  %v808 = vrcp.pop %v803
  %v809 = vrcp.pop %v806
  %v810 = vmul.f32 %v793, %v807
  %v811 = vmul.f32 %v795, %v808
  %v812 = vmul.f32 %v797, %v809
  %813 = vrot.lane.b32.xlu0 %v212, 40
  %v814 = vpop.permute.xlu0 %813
  %815 = vrot.lane.b32.xlu0 %v215, 40
  %v816 = vpop.permute.xlu0 %815
  %817 = vrot.lane.b32.xlu0 %v218, 40
  %v818 = vpop.permute.xlu0 %817
  %v822 = vsel %vm280, %v810, 0
  %v825 = vsel %vm280, %v811, 0
  %v828 = vsel %vm280, %v812, 0
  %v830 = vsel %vm332, %v818, 0
  %832 = vmatpush.msra.mxu0 0.0
  %833 = vmatpush.msra.mxu0 0.0
  %834 = vmatpush.msra.mxu0 0.0
  %835 = vmatpush.msra.mxu0 0.0
  %836 = vmatpush.msra.mxu0 0.0
  %837 = vmatpush.msra.mxu0 0.0
  %838 = vmatpush.msra.mxu0 0.0
  %839 = vmatpush.msra.mxu0 0.0
  %840 = vmatpush.msra.mxu0 0.0
  %841 = vmatpush.msra.mxu0 0.0
  %842 = vmatpush.msra.mxu0 0.0
  %843 = vmatpush.msra.mxu0 0.0
  %844 = vmatpush.msra.mxu0 0.0
  %845 = vmatpush.msra.mxu0 %v830
  %846 = vmatpush.msra.mxu0 %v816
  %847 = vmatpush.msra.mxu0 %v814
  %848 = vmatmul.f32.gmra.mxu0 %v822
  %v849 = vpop.f32.mrf.mxu0
  %v850 = vadd.f32 0.0, %v849
  %851 = vmatmul.f32.gmra.mxu0 %v825
  %v852 = vpop.f32.mrf.mxu0
  %v853 = vadd.f32 0.0, %v852
  %854 = vmatmul.f32.gmra.mxu0 %v828
  %v855 = vpop.f32.mrf.mxu0
  %v856 = vadd.f32 0.0, %v855
  %857 = vdwg.mxu0
  %s858 = scalar_lea.vmem %s4, 24
  %v859 = vld [vmem:[%s858] sm:$0xff]
  %v861 = vsel %vm238, %v850, 0
  %v864 = vsel %vm238, %v853, 0
  %v867 = vsel %vm238, %v856, 0
  %869 = vmatpush.msra.mxu0 0.0
  %870 = vmatpush.msra.mxu0 0.0
  %871 = vmatpush.msra.mxu0 0.0
  %872 = vmatpush.msra.mxu0 0.0
  %873 = vmatpush.msra.mxu0 0.0
  %874 = vmatpush.msra.mxu0 0.0
  %875 = vmatpush.msra.mxu0 0.0
  %876 = vmatpush.msra.mxu0 0.0
  %877 = vmatpush.msra.mxu0 0.0
  %878 = vmatpush.msra.mxu0 0.0
  %879 = vmatpush.msra.mxu0 0.0
  %880 = vmatpush.msra.mxu0 0.0
  %881 = vmatpush.msra.mxu0 0.0
  %882 = vmatpush.msra.mxu0 0.0
  %883 = vmatpush.msra.mxu0 0.0
  %884 = vmatpush.msra.mxu0 %v859
  %885 = vmatmul.f32.gmra.mxu0 %v861
  %v886 = vpop.f32.mrf.mxu0
  %v887 = vadd.f32 0.0, %v886
  %888 = vmatmul.f32.gmra.mxu0 %v864
  %v889 = vpop.f32.mrf.mxu0
  %v890 = vadd.f32 0.0, %v889
  %891 = vmatmul.f32.gmra.mxu0 %v867
  %v892 = vpop.f32.mrf.mxu0
  %v893 = vadd.f32 0.0, %v892
  %894 = vdwg.mxu0
  %v895 = vadd.f32 %v727, %v887
  %v896 = vadd.f32 %v728, %v890
  %v897 = vadd.f32 %v729, %v893
  %898 = vst.msk [vmem:[#allocation2] sm:$0xff] %vm40, %v895
  %899 = vst.msk [vmem:[#allocation2 + $0x8] sm:$0xff] %vm40, %v896
  %vm900 = vcmask 253952
  %901 = vst.msk [vmem:[#allocation2 + $0x10] sm:$0x1] %vm900, %v897
  %v902 = vmul.f32 %v221, 0.35355338
  %v903 = vmul.f32 %v224, 0.35355338
  %vm906 = vcmask 1046528
  %v907 = vrot.slane %v228, 1
  %v908 = vrot.slane %v902, 1
  %v909 = vsel %vm906, %v907, %v908
  %v910 = vrot.slane %v903, 1
  %v911 = vsel %vm906, %v908, %v910
  %v914 = vrot.slane %v218, 1
  %v915 = vrot.slane %v221, 1
  %v916 = vsel %vm906, %v914, %v915
  %v917 = vrot.slane %v224, 1
  %v918 = vsel %vm906, %v915, %v917
  %919 = vrot.lane.b32.xlu0 %v916, 96
  %v920 = vpop.permute.xlu0 %919
  %921 = vrot.lane.b32.xlu0 %v918, 96
  %v922 = vpop.permute.xlu0 %921
  %923 = vrot.lane.b32.xlu0 %v917, 96
  %v924 = vpop.permute.xlu0 %923
  %v925 = vsel %vm238, %v909, 0
  %v927 = vsel %vm238, %v911, 0
  %v929 = vsel %vm238, %v910, 0
  %v931 = vsel %vm238, %v920, 0
  %v933 = vsel %vm238, %v922, 0
  %v935 = vsel %vm238, %v924, 0
  %937 = vmatpush.xpose.msra.mxu0 0.0
  %938 = vmatpush.xpose.msra.mxu0 0.0
  %939 = vmatpush.xpose.msra.mxu0 0.0
  %940 = vmatpush.xpose.msra.mxu0 0.0
  %941 = vmatpush.xpose.msra.mxu0 0.0
  %942 = vmatpush.xpose.msra.mxu0 0.0
  %943 = vmatpush.xpose.msra.mxu0 0.0
  %944 = vmatpush.xpose.msra.mxu0 0.0
  %945 = vmatpush.xpose.msra.mxu0 0.0
  %946 = vmatpush.xpose.msra.mxu0 0.0
  %947 = vmatpush.xpose.msra.mxu0 0.0
  %948 = vmatpush.xpose.msra.mxu0 0.0
  %949 = vmatpush.xpose.msra.mxu0 0.0
  %950 = vmatpush.xpose.msra.mxu0 %v935
  %951 = vmatpush.xpose.msra.mxu0 %v933
  %952 = vmatpush.xpose.msra.mxu0 %v931
  %953 = vmatmul.f32.gmra.mxu0 %v925
  %v954 = vpop.f32.mrf.mxu0
  %v955 = vadd.f32 0.0, %v954
  %956 = vmatmul.f32.gmra.mxu0 %v927
  %v957 = vpop.f32.mrf.mxu0
  %v958 = vadd.f32 0.0, %v957
  %959 = vmatmul.f32.gmra.mxu0 %v929
  %v960 = vpop.f32.mrf.mxu0
  %v961 = vadd.f32 0.0, %v960
  %962 = vdwg.mxu0
  %v963 = vsel %vm280, %v955, -inf
  %964 = vmax.xlane.f32.xlu0 %v963
  %v965 = vpop.xlane.xlu0 %964
  %v966 = vsel %vm280, %v958, -inf
  %967 = vmax.xlane.f32.xlu0 %v966
  %v968 = vpop.xlane.xlu0 %967
  %v969 = vsel %vm287, %v961, -inf
  %970 = vmax.xlane.f32.xlu0 %v969
  %v971 = vpop.xlane.xlu0 %970
  %v972 = vsub.f32 %v955, %v965
  %v973 = vsub.f32 %v958, %v968
  %v974 = vsub.f32 %v961, %v971
  %v975 = vmul.f32 %v972, 1.442695
  %v976 = vpow.pop %v975
  %v977 = vmul.f32 %v973, 1.442695
  %v978 = vpow.pop %v977
  %v979 = vmul.f32 %v974, 1.442695
  %v980 = vpow.pop %v979
  %v981 = vsel %vm280, %v976, 0.0
  %982 = vadd.xlane.f32.xlu0 %v981
  %v983 = vpop.xlane.xlu0 %982
  %v984 = vsel %vm280, %v978, 0.0
  %985 = vadd.xlane.f32.xlu0 %v984
  %v986 = vpop.xlane.xlu0 %985
  %v987 = vsel %vm287, %v980, 0.0
  %988 = vadd.xlane.f32.xlu0 %v987
  %v989 = vpop.xlane.xlu0 %988
  %v990 = vrcp.pop %v983
  %v991 = vrcp.pop %v986
  %v992 = vrcp.pop %v989
  %v993 = vmul.f32 %v976, %v990
  %v994 = vmul.f32 %v978, %v991
  %v995 = vmul.f32 %v980, %v992
  %996 = vrot.lane.b32.xlu0 %v916, 64
  %v997 = vpop.permute.xlu0 %996
  %998 = vrot.lane.b32.xlu0 %v918, 64
  %v999 = vpop.permute.xlu0 %998
  %1000 = vrot.lane.b32.xlu0 %v917, 64
  %v1001 = vpop.permute.xlu0 %1000
  %v1005 = vsel %vm280, %v993, 0
  %v1008 = vsel %vm280, %v994, 0
  %v1011 = vsel %vm280, %v995, 0
  %v1013 = vsel %vm332, %v1001, 0
  %1015 = vmatpush.msra.mxu0 0.0
  %1016 = vmatpush.msra.mxu0 0.0
  %1017 = vmatpush.msra.mxu0 0.0
  %1018 = vmatpush.msra.mxu0 0.0
  %1019 = vmatpush.msra.mxu0 0.0
  %1020 = vmatpush.msra.mxu0 0.0
  %1021 = vmatpush.msra.mxu0 0.0
  %1022 = vmatpush.msra.mxu0 0.0
  %1023 = vmatpush.msra.mxu0 0.0
  %1024 = vmatpush.msra.mxu0 0.0
  %1025 = vmatpush.msra.mxu0 0.0
  %1026 = vmatpush.msra.mxu0 0.0
  %1027 = vmatpush.msra.mxu0 0.0
  %1028 = vmatpush.msra.mxu0 %v1013
  %1029 = vmatpush.msra.mxu0 %v999
  %1030 = vmatpush.msra.mxu0 %v997
  %1031 = vmatmul.f32.gmra.mxu0 %v1005
  %v1032 = vpop.f32.mrf.mxu0
  %v1033 = vadd.f32 0.0, %v1032
  %1034 = vmatmul.f32.gmra.mxu0 %v1008
  %v1035 = vpop.f32.mrf.mxu0
  %v1036 = vadd.f32 0.0, %v1035
  %1037 = vmatmul.f32.gmra.mxu0 %v1011
  %v1038 = vpop.f32.mrf.mxu0
  %v1039 = vadd.f32 0.0, %v1038
  %1040 = vdwg.mxu0
  %v1041 = vld [vmem:[%s4] sm:$0xff]
  %1042 = vrot.lane.b32.xlu0 %v909, 120
  %v1043 = vpop.permute.xlu0 %1042
  %1044 = vrot.lane.b32.xlu0 %v911, 120
  %v1045 = vpop.permute.xlu0 %1044
  %1046 = vrot.lane.b32.xlu0 %v910, 120
  %v1047 = vpop.permute.xlu0 %1046
  %1048 = vrot.lane.b32.xlu0 %v916, 88
  %v1049 = vpop.permute.xlu0 %1048
  %1050 = vrot.lane.b32.xlu0 %v918, 88
  %v1051 = vpop.permute.xlu0 %1050
  %1052 = vrot.lane.b32.xlu0 %v917, 88
  %v1053 = vpop.permute.xlu0 %1052
  %v1054 = vsel %vm238, %v1043, 0
  %v1056 = vsel %vm238, %v1045, 0
  %v1058 = vsel %vm238, %v1047, 0
  %v1060 = vsel %vm238, %v1049, 0
  %v1062 = vsel %vm238, %v1051, 0
  %v1064 = vsel %vm238, %v1053, 0
  %1066 = vmatpush.xpose.msra.mxu0 0.0
  %1067 = vmatpush.xpose.msra.mxu0 0.0
  %1068 = vmatpush.xpose.msra.mxu0 0.0
  %1069 = vmatpush.xpose.msra.mxu0 0.0
  %1070 = vmatpush.xpose.msra.mxu0 0.0
  %1071 = vmatpush.xpose.msra.mxu0 0.0
  %1072 = vmatpush.xpose.msra.mxu0 0.0
  %1073 = vmatpush.xpose.msra.mxu0 0.0
  %1074 = vmatpush.xpose.msra.mxu0 0.0
  %1075 = vmatpush.xpose.msra.mxu0 0.0
  %1076 = vmatpush.xpose.msra.mxu0 0.0
  %1077 = vmatpush.xpose.msra.mxu0 0.0
  %1078 = vmatpush.xpose.msra.mxu0 0.0
  %1079 = vmatpush.xpose.msra.mxu0 %v1064
  %1080 = vmatpush.xpose.msra.mxu0 %v1062
  %1081 = vmatpush.xpose.msra.mxu0 %v1060
  %1082 = vmatmul.f32.gmra.mxu0 %v1054
  %v1083 = vpop.f32.mrf.mxu0
  %v1084 = vadd.f32 0.0, %v1083
  %1085 = vmatmul.f32.gmra.mxu0 %v1056
  %v1086 = vpop.f32.mrf.mxu0
  %v1087 = vadd.f32 0.0, %v1086
  %1088 = vmatmul.f32.gmra.mxu0 %v1058
  %v1089 = vpop.f32.mrf.mxu0
  %v1090 = vadd.f32 0.0, %v1089
  %1091 = vdwg.mxu0
  %v1092 = vsel %vm280, %v1084, -inf
  %1093 = vmax.xlane.f32.xlu0 %v1092
  %v1094 = vpop.xlane.xlu0 %1093
  %v1095 = vsel %vm280, %v1087, -inf
  %1096 = vmax.xlane.f32.xlu0 %v1095
  %v1097 = vpop.xlane.xlu0 %1096
  %v1098 = vsel %vm287, %v1090, -inf
  %1099 = vmax.xlane.f32.xlu0 %v1098
  %v1100 = vpop.xlane.xlu0 %1099
  %v1101 = vsub.f32 %v1084, %v1094
  %v1102 = vsub.f32 %v1087, %v1097
  %v1103 = vsub.f32 %v1090, %v1100
  %v1104 = vmul.f32 %v1101, 1.442695
  %v1105 = vpow.pop %v1104
  %v1106 = vmul.f32 %v1102, 1.442695
  %v1107 = vpow.pop %v1106
  %v1108 = vmul.f32 %v1103, 1.442695
  %v1109 = vpow.pop %v1108
  %v1110 = vsel %vm280, %v1105, 0.0
  %1111 = vadd.xlane.f32.xlu0 %v1110
  %v1112 = vpop.xlane.xlu0 %1111
  %v1113 = vsel %vm280, %v1107, 0.0
  %1114 = vadd.xlane.f32.xlu0 %v1113
  %v1115 = vpop.xlane.xlu0 %1114
  %v1116 = vsel %vm287, %v1109, 0.0
  %1117 = vadd.xlane.f32.xlu0 %v1116
  %v1118 = vpop.xlane.xlu0 %1117
  %v1119 = vrcp.pop %v1112
  %v1120 = vrcp.pop %v1115
  %v1121 = vrcp.pop %v1118
  %v1122 = vmul.f32 %v1105, %v1119
  %v1123 = vmul.f32 %v1107, %v1120
  %v1124 = vmul.f32 %v1109, %v1121
  %1125 = vrot.lane.b32.xlu0 %v916, 56
  %v1126 = vpop.permute.xlu0 %1125
  %1127 = vrot.lane.b32.xlu0 %v918, 56
  %v1128 = vpop.permute.xlu0 %1127
  %1129 = vrot.lane.b32.xlu0 %v917, 56
  %v1130 = vpop.permute.xlu0 %1129
  %v1134 = vsel %vm280, %v1122, 0
  %v1137 = vsel %vm280, %v1123, 0
  %v1140 = vsel %vm280, %v1124, 0
  %v1142 = vsel %vm332, %v1130, 0
  %1144 = vmatpush.msra.mxu0 0.0
  %1145 = vmatpush.msra.mxu0 0.0
  %1146 = vmatpush.msra.mxu0 0.0
  %1147 = vmatpush.msra.mxu0 0.0
  %1148 = vmatpush.msra.mxu0 0.0
  %1149 = vmatpush.msra.mxu0 0.0
  %1150 = vmatpush.msra.mxu0 0.0
  %1151 = vmatpush.msra.mxu0 0.0
  %1152 = vmatpush.msra.mxu0 0.0
  %1153 = vmatpush.msra.mxu0 0.0
  %1154 = vmatpush.msra.mxu0 0.0
  %1155 = vmatpush.msra.mxu0 0.0
  %1156 = vmatpush.msra.mxu0 0.0
  %1157 = vmatpush.msra.mxu0 %v1142
  %1158 = vmatpush.msra.mxu0 %v1128
  %1159 = vmatpush.msra.mxu0 %v1126
  %1160 = vmatmul.f32.gmra.mxu0 %v1134
  %v1161 = vpop.f32.mrf.mxu0
  %v1162 = vadd.f32 0.0, %v1161
  %1163 = vmatmul.f32.gmra.mxu0 %v1137
  %v1164 = vpop.f32.mrf.mxu0
  %v1165 = vadd.f32 0.0, %v1164
  %1166 = vmatmul.f32.gmra.mxu0 %v1140
  %v1167 = vpop.f32.mrf.mxu0
  %v1168 = vadd.f32 0.0, %v1167
  %1169 = vdwg.mxu0
  %v1170 = vld [vmem:[%s490] sm:$0xff]
  %v1172 = vsel %vm238, %v1162, 0
  %v1175 = vsel %vm238, %v1165, 0
  %v1178 = vsel %vm238, %v1168, 0
  %1180 = vmatpush.msra.mxu0 0.0
  %1181 = vmatpush.msra.mxu0 0.0
  %1182 = vmatpush.msra.mxu0 0.0
  %1183 = vmatpush.msra.mxu0 0.0
  %1184 = vmatpush.msra.mxu0 0.0
  %1185 = vmatpush.msra.mxu0 0.0
  %1186 = vmatpush.msra.mxu0 0.0
  %1187 = vmatpush.msra.mxu0 0.0
  %1188 = vmatpush.msra.mxu0 0.0
  %1189 = vmatpush.msra.mxu0 0.0
  %1190 = vmatpush.msra.mxu0 0.0
  %1191 = vmatpush.msra.mxu0 0.0
  %1192 = vmatpush.msra.mxu0 0.0
  %1193 = vmatpush.msra.mxu0 0.0
  %1194 = vmatpush.msra.mxu0 0.0
  %1195 = vmatpush.msra.mxu0 %v1170
  %1196 = vmatmul.f32.gmra.mxu0 %v1172
  %v1197 = vpop.f32.mrf.mxu0
  %v1198 = vadd.f32 0.0, %v1197
  %1199 = vmatmul.f32.gmra.mxu0 %v1175
  %v1200 = vpop.f32.mrf.mxu0
  %v1201 = vadd.f32 0.0, %v1200
  %1202 = vmatmul.f32.gmra.mxu0 %v1178
  %v1203 = vpop.f32.mrf.mxu0
  %v1204 = vadd.f32 0.0, %v1203
  %1205 = vdwg.mxu0
  %v1207 = vsel %vm238, %v1033, 0
  %v1210 = vsel %vm238, %v1036, 0
  %v1213 = vsel %vm238, %v1039, 0
  %1215 = vmatpush.msra.mxu0 0.0
  %1216 = vmatpush.msra.mxu0 0.0
  %1217 = vmatpush.msra.mxu0 0.0
  %1218 = vmatpush.msra.mxu0 0.0
  %1219 = vmatpush.msra.mxu0 0.0
  %1220 = vmatpush.msra.mxu0 0.0
  %1221 = vmatpush.msra.mxu0 0.0
  %1222 = vmatpush.msra.mxu0 0.0
  %1223 = vmatpush.msra.mxu0 0.0
  %1224 = vmatpush.msra.mxu0 0.0
  %1225 = vmatpush.msra.mxu0 0.0
  %1226 = vmatpush.msra.mxu0 0.0
  %1227 = vmatpush.msra.mxu0 0.0
  %1228 = vmatpush.msra.mxu0 0.0
  %1229 = vmatpush.msra.mxu0 0.0
  %1230 = vmatpush.msra.mxu0 %v1041
  %1231 = vmatmul.f32.gmra.mxu0 %v1207
  %v1232 = vpop.f32.mrf.mxu0
  %v1233 = vadd.f32 %v1198, %v1232
  %1234 = vmatmul.f32.gmra.mxu0 %v1210
  %v1235 = vpop.f32.mrf.mxu0
  %v1236 = vadd.f32 %v1201, %v1235
  %1237 = vmatmul.f32.gmra.mxu0 %v1213
  %v1238 = vpop.f32.mrf.mxu0
  %v1239 = vadd.f32 %v1204, %v1238
  %1240 = vdwg.mxu0
  %1241 = vrot.lane.b32.xlu0 %v909, 112
  %v1242 = vpop.permute.xlu0 %1241
  %1243 = vrot.lane.b32.xlu0 %v911, 112
  %v1244 = vpop.permute.xlu0 %1243
  %1245 = vrot.lane.b32.xlu0 %v910, 112
  %v1246 = vpop.permute.xlu0 %1245
  %1247 = vrot.lane.b32.xlu0 %v916, 80
  %v1248 = vpop.permute.xlu0 %1247
  %1249 = vrot.lane.b32.xlu0 %v918, 80
  %v1250 = vpop.permute.xlu0 %1249
  %1251 = vrot.lane.b32.xlu0 %v917, 80
  %v1252 = vpop.permute.xlu0 %1251
  %v1253 = vsel %vm238, %v1242, 0
  %v1255 = vsel %vm238, %v1244, 0
  %v1257 = vsel %vm238, %v1246, 0
  %v1259 = vsel %vm238, %v1248, 0
  %v1261 = vsel %vm238, %v1250, 0
  %v1263 = vsel %vm238, %v1252, 0
  %1265 = vmatpush.xpose.msra.mxu0 0.0
  %1266 = vmatpush.xpose.msra.mxu0 0.0
  %1267 = vmatpush.xpose.msra.mxu0 0.0
  %1268 = vmatpush.xpose.msra.mxu0 0.0
  %1269 = vmatpush.xpose.msra.mxu0 0.0
  %1270 = vmatpush.xpose.msra.mxu0 0.0
  %1271 = vmatpush.xpose.msra.mxu0 0.0
  %1272 = vmatpush.xpose.msra.mxu0 0.0
  %1273 = vmatpush.xpose.msra.mxu0 0.0
  %1274 = vmatpush.xpose.msra.mxu0 0.0
  %1275 = vmatpush.xpose.msra.mxu0 0.0
  %1276 = vmatpush.xpose.msra.mxu0 0.0
  %1277 = vmatpush.xpose.msra.mxu0 0.0
  %1278 = vmatpush.xpose.msra.mxu0 %v1263
  %1279 = vmatpush.xpose.msra.mxu0 %v1261
  %1280 = vmatpush.xpose.msra.mxu0 %v1259
  %1281 = vmatmul.f32.gmra.mxu0 %v1253
  %v1282 = vpop.f32.mrf.mxu0
  %v1283 = vadd.f32 0.0, %v1282
  %1284 = vmatmul.f32.gmra.mxu0 %v1255
  %v1285 = vpop.f32.mrf.mxu0
  %v1286 = vadd.f32 0.0, %v1285
  %1287 = vmatmul.f32.gmra.mxu0 %v1257
  %v1288 = vpop.f32.mrf.mxu0
  %v1289 = vadd.f32 0.0, %v1288
  %1290 = vdwg.mxu0
  %v1291 = vsel %vm280, %v1283, -inf
  %1292 = vmax.xlane.f32.xlu0 %v1291
  %v1293 = vpop.xlane.xlu0 %1292
  %v1294 = vsel %vm280, %v1286, -inf
  %1295 = vmax.xlane.f32.xlu0 %v1294
  %v1296 = vpop.xlane.xlu0 %1295
  %v1297 = vsel %vm287, %v1289, -inf
  %1298 = vmax.xlane.f32.xlu0 %v1297
  %v1299 = vpop.xlane.xlu0 %1298
  %v1300 = vsub.f32 %v1283, %v1293
  %v1301 = vsub.f32 %v1286, %v1296
  %v1302 = vsub.f32 %v1289, %v1299
  %v1303 = vmul.f32 %v1300, 1.442695
  %v1304 = vpow.pop %v1303
  %v1305 = vmul.f32 %v1301, 1.442695
  %v1306 = vpow.pop %v1305
  %v1307 = vmul.f32 %v1302, 1.442695
  %v1308 = vpow.pop %v1307
  %v1309 = vsel %vm280, %v1304, 0.0
  %1310 = vadd.xlane.f32.xlu0 %v1309
  %v1311 = vpop.xlane.xlu0 %1310
  %v1312 = vsel %vm280, %v1306, 0.0
  %1313 = vadd.xlane.f32.xlu0 %v1312
  %v1314 = vpop.xlane.xlu0 %1313
  %v1315 = vsel %vm287, %v1308, 0.0
  %1316 = vadd.xlane.f32.xlu0 %v1315
  %v1317 = vpop.xlane.xlu0 %1316
  %v1318 = vrcp.pop %v1311
  %v1319 = vrcp.pop %v1314
  %v1320 = vrcp.pop %v1317
  %v1321 = vmul.f32 %v1304, %v1318
  %v1322 = vmul.f32 %v1306, %v1319
  %v1323 = vmul.f32 %v1308, %v1320
  %1324 = vrot.lane.b32.xlu0 %v916, 48
  %v1325 = vpop.permute.xlu0 %1324
  %1326 = vrot.lane.b32.xlu0 %v918, 48
  %v1327 = vpop.permute.xlu0 %1326
  %1328 = vrot.lane.b32.xlu0 %v917, 48
  %v1329 = vpop.permute.xlu0 %1328
  %v1333 = vsel %vm280, %v1321, 0
  %v1336 = vsel %vm280, %v1322, 0
  %v1339 = vsel %vm280, %v1323, 0
  %v1341 = vsel %vm332, %v1329, 0
  %1343 = vmatpush.msra.mxu0 0.0
  %1344 = vmatpush.msra.mxu0 0.0
  %1345 = vmatpush.msra.mxu0 0.0
  %1346 = vmatpush.msra.mxu0 0.0
  %1347 = vmatpush.msra.mxu0 0.0
  %1348 = vmatpush.msra.mxu0 0.0
  %1349 = vmatpush.msra.mxu0 0.0
  %1350 = vmatpush.msra.mxu0 0.0
  %1351 = vmatpush.msra.mxu0 0.0
  %1352 = vmatpush.msra.mxu0 0.0
  %1353 = vmatpush.msra.mxu0 0.0
  %1354 = vmatpush.msra.mxu0 0.0
  %1355 = vmatpush.msra.mxu0 0.0
  %1356 = vmatpush.msra.mxu0 %v1341
  %1357 = vmatpush.msra.mxu0 %v1327
  %1358 = vmatpush.msra.mxu0 %v1325
  %1359 = vmatmul.f32.gmra.mxu0 %v1333
  %v1360 = vpop.f32.mrf.mxu0
  %v1361 = vadd.f32 0.0, %v1360
  %1362 = vmatmul.f32.gmra.mxu0 %v1336
  %v1363 = vpop.f32.mrf.mxu0
  %v1364 = vadd.f32 0.0, %v1363
  %1365 = vmatmul.f32.gmra.mxu0 %v1339
  %v1366 = vpop.f32.mrf.mxu0
  %v1367 = vadd.f32 0.0, %v1366
  %1368 = vdwg.mxu0
  %v1369 = vld [vmem:[%s690] sm:$0xff]
  %v1371 = vsel %vm238, %v1361, 0
  %v1374 = vsel %vm238, %v1364, 0
  %v1377 = vsel %vm238, %v1367, 0
  %1379 = vmatpush.msra.mxu0 0.0
  %1380 = vmatpush.msra.mxu0 0.0
  %1381 = vmatpush.msra.mxu0 0.0
  %1382 = vmatpush.msra.mxu0 0.0
  %1383 = vmatpush.msra.mxu0 0.0
  %1384 = vmatpush.msra.mxu0 0.0
  %1385 = vmatpush.msra.mxu0 0.0
  %1386 = vmatpush.msra.mxu0 0.0
  %1387 = vmatpush.msra.mxu0 0.0
  %1388 = vmatpush.msra.mxu0 0.0
  %1389 = vmatpush.msra.mxu0 0.0
  %1390 = vmatpush.msra.mxu0 0.0
  %1391 = vmatpush.msra.mxu0 0.0
  %1392 = vmatpush.msra.mxu0 0.0
  %1393 = vmatpush.msra.mxu0 0.0
  %1394 = vmatpush.msra.mxu0 %v1369
  %1395 = vmatmul.f32.gmra.mxu0 %v1371
  %v1396 = vpop.f32.mrf.mxu0
  %v1397 = vadd.f32 0.0, %v1396
  %1398 = vmatmul.f32.gmra.mxu0 %v1374
  %v1399 = vpop.f32.mrf.mxu0
  %v1400 = vadd.f32 0.0, %v1399
  %1401 = vmatmul.f32.gmra.mxu0 %v1377
  %v1402 = vpop.f32.mrf.mxu0
  %v1403 = vadd.f32 0.0, %v1402
  %1404 = vdwg.mxu0
  %v1405 = vadd.f32 %v1233, %v1397
  %v1406 = vadd.f32 %v1236, %v1400
  %v1407 = vadd.f32 %v1239, %v1403
  %1408 = vrot.lane.b32.xlu0 %v909, 104
  %v1409 = vpop.permute.xlu0 %1408
  %1410 = vrot.lane.b32.xlu0 %v911, 104
  %v1411 = vpop.permute.xlu0 %1410
  %1412 = vrot.lane.b32.xlu0 %v910, 104
  %v1413 = vpop.permute.xlu0 %1412
  %1414 = vrot.lane.b32.xlu0 %v916, 72
  %v1415 = vpop.permute.xlu0 %1414
  %1416 = vrot.lane.b32.xlu0 %v918, 72
  %v1417 = vpop.permute.xlu0 %1416
  %1418 = vrot.lane.b32.xlu0 %v917, 72
  %v1419 = vpop.permute.xlu0 %1418
  %v1420 = vsel %vm238, %v1409, 0
  %v1422 = vsel %vm238, %v1411, 0
  %v1424 = vsel %vm238, %v1413, 0
  %v1426 = vsel %vm238, %v1415, 0
  %v1428 = vsel %vm238, %v1417, 0
  %v1430 = vsel %vm238, %v1419, 0
  %1432 = vmatpush.xpose.msra.mxu0 0.0
  %1433 = vmatpush.xpose.msra.mxu0 0.0
  %1434 = vmatpush.xpose.msra.mxu0 0.0
  %1435 = vmatpush.xpose.msra.mxu0 0.0
  %1436 = vmatpush.xpose.msra.mxu0 0.0
  %1437 = vmatpush.xpose.msra.mxu0 0.0
  %1438 = vmatpush.xpose.msra.mxu0 0.0
  %1439 = vmatpush.xpose.msra.mxu0 0.0
  %1440 = vmatpush.xpose.msra.mxu0 0.0
  %1441 = vmatpush.xpose.msra.mxu0 0.0
  %1442 = vmatpush.xpose.msra.mxu0 0.0
  %1443 = vmatpush.xpose.msra.mxu0 0.0
  %1444 = vmatpush.xpose.msra.mxu0 0.0
  %1445 = vmatpush.xpose.msra.mxu0 %v1430
  %1446 = vmatpush.xpose.msra.mxu0 %v1428
  %1447 = vmatpush.xpose.msra.mxu0 %v1426
  %1448 = vmatmul.f32.gmra.mxu0 %v1420
  %v1449 = vpop.f32.mrf.mxu0
  %v1450 = vadd.f32 0.0, %v1449
  %1451 = vmatmul.f32.gmra.mxu0 %v1422
  %v1452 = vpop.f32.mrf.mxu0
  %v1453 = vadd.f32 0.0, %v1452
  %1454 = vmatmul.f32.gmra.mxu0 %v1424
  %v1455 = vpop.f32.mrf.mxu0
  %v1456 = vadd.f32 0.0, %v1455
  %1457 = vdwg.mxu0
  %v1458 = vsel %vm280, %v1450, -inf
  %1459 = vmax.xlane.f32.xlu0 %v1458
  %v1460 = vpop.xlane.xlu0 %1459
  %v1461 = vsel %vm280, %v1453, -inf
  %1462 = vmax.xlane.f32.xlu0 %v1461
  %v1463 = vpop.xlane.xlu0 %1462
  %v1464 = vsel %vm287, %v1456, -inf
  %1465 = vmax.xlane.f32.xlu0 %v1464
  %v1466 = vpop.xlane.xlu0 %1465
  %v1467 = vsub.f32 %v1450, %v1460
  %v1468 = vsub.f32 %v1453, %v1463
  %v1469 = vsub.f32 %v1456, %v1466
  %v1470 = vmul.f32 %v1467, 1.442695
  %v1471 = vpow.pop %v1470
  %v1472 = vmul.f32 %v1468, 1.442695
  %v1473 = vpow.pop %v1472
  %v1474 = vmul.f32 %v1469, 1.442695
  %v1475 = vpow.pop %v1474
  %v1476 = vsel %vm280, %v1471, 0.0
  %1477 = vadd.xlane.f32.xlu0 %v1476
  %v1478 = vpop.xlane.xlu0 %1477
  %v1479 = vsel %vm280, %v1473, 0.0
  %1480 = vadd.xlane.f32.xlu0 %v1479
  %v1481 = vpop.xlane.xlu0 %1480
  %v1482 = vsel %vm287, %v1475, 0.0
  %1483 = vadd.xlane.f32.xlu0 %v1482
  %v1484 = vpop.xlane.xlu0 %1483
  %v1485 = vrcp.pop %v1478
  %v1486 = vrcp.pop %v1481
  %v1487 = vrcp.pop %v1484
  %v1488 = vmul.f32 %v1471, %v1485
  %v1489 = vmul.f32 %v1473, %v1486
  %v1490 = vmul.f32 %v1475, %v1487
  %1491 = vrot.lane.b32.xlu0 %v916, 40
  %v1492 = vpop.permute.xlu0 %1491
  %1493 = vrot.lane.b32.xlu0 %v918, 40
  %v1494 = vpop.permute.xlu0 %1493
  %1495 = vrot.lane.b32.xlu0 %v917, 40
  %v1496 = vpop.permute.xlu0 %1495
  %v1500 = vsel %vm280, %v1488, 0
  %v1503 = vsel %vm280, %v1489, 0
  %v1506 = vsel %vm280, %v1490, 0
  %v1508 = vsel %vm332, %v1496, 0
  %1510 = vmatpush.msra.mxu0 0.0
  %1511 = vmatpush.msra.mxu0 0.0
  %1512 = vmatpush.msra.mxu0 0.0
  %1513 = vmatpush.msra.mxu0 0.0
  %1514 = vmatpush.msra.mxu0 0.0
  %1515 = vmatpush.msra.mxu0 0.0
  %1516 = vmatpush.msra.mxu0 0.0
  %1517 = vmatpush.msra.mxu0 0.0
  %1518 = vmatpush.msra.mxu0 0.0
  %1519 = vmatpush.msra.mxu0 0.0
  %1520 = vmatpush.msra.mxu0 0.0
  %1521 = vmatpush.msra.mxu0 0.0
  %1522 = vmatpush.msra.mxu0 0.0
  %1523 = vmatpush.msra.mxu0 %v1508
  %1524 = vmatpush.msra.mxu0 %v1494
  %1525 = vmatpush.msra.mxu0 %v1492
  %1526 = vmatmul.f32.gmra.mxu0 %v1500
  %v1527 = vpop.f32.mrf.mxu0
  %v1528 = vadd.f32 0.0, %v1527
  %1529 = vmatmul.f32.gmra.mxu0 %v1503
  %v1530 = vpop.f32.mrf.mxu0
  %v1531 = vadd.f32 0.0, %v1530
  %1532 = vmatmul.f32.gmra.mxu0 %v1506
  %v1533 = vpop.f32.mrf.mxu0
  %v1534 = vadd.f32 0.0, %v1533
  %1535 = vdwg.mxu0
  %v1536 = vld [vmem:[%s858] sm:$0xff]
  %v1538 = vsel %vm238, %v1528, 0
  %v1541 = vsel %vm238, %v1531, 0
  %v1544 = vsel %vm238, %v1534, 0
  %1546 = vmatpush.msra.mxu0 0.0
  %1547 = vmatpush.msra.mxu0 0.0
  %1548 = vmatpush.msra.mxu0 0.0
  %1549 = vmatpush.msra.mxu0 0.0
  %1550 = vmatpush.msra.mxu0 0.0
  %1551 = vmatpush.msra.mxu0 0.0
  %1552 = vmatpush.msra.mxu0 0.0
  %1553 = vmatpush.msra.mxu0 0.0
  %1554 = vmatpush.msra.mxu0 0.0
  %1555 = vmatpush.msra.mxu0 0.0
  %1556 = vmatpush.msra.mxu0 0.0
  %1557 = vmatpush.msra.mxu0 0.0
  %1558 = vmatpush.msra.mxu0 0.0
  %1559 = vmatpush.msra.mxu0 0.0
  %1560 = vmatpush.msra.mxu0 0.0
  %1561 = vmatpush.msra.mxu0 %v1536
  %1562 = vmatmul.f32.gmra.mxu0 %v1538
  %v1563 = vpop.f32.mrf.mxu0
  %v1564 = vadd.f32 0.0, %v1563
  %1565 = vmatmul.f32.gmra.mxu0 %v1541
  %v1566 = vpop.f32.mrf.mxu0
  %v1567 = vadd.f32 0.0, %v1566
  %1568 = vmatmul.f32.gmra.mxu0 %v1544
  %v1569 = vpop.f32.mrf.mxu0
  %v1570 = vadd.f32 0.0, %v1569
  %1571 = vdwg.mxu0
  %v1572 = vadd.f32 %v1405, %v1564
  %v1573 = vadd.f32 %v1406, %v1567
  %v1574 = vadd.f32 %v1407, %v1570
  %1575 = vst.msk [vmem:[#allocation2 + $0x11] sm:$0xff] %vm40, %v1572
  %1576 = vst.msk [vmem:[#allocation2 + $0x19] sm:$0xff] %vm40, %v1573
  %1577 = vst.msk [vmem:[#allocation2 + $0x21] sm:$0x1] %vm900, %v1574
  %v1578 = vld [vmem:[#allocation2] sm:$0xff]
  %v1579 = vld [vmem:[#allocation2 + $0x8] sm:$0xff]
  %v1580 = vld [vmem:[#allocation2 + $0x10] sm:$0xff]
  %v1581 = vld [vmem:[#allocation2 + $0x18] sm:$0xff]
  %v1582 = vld [vmem:[#allocation2 + $0x20] sm:$0x3]
  %v1583 = vadd.f32 %v29, %v1578
  %v1584 = vadd.f32 %v30, %v1579
  %v1585 = vadd.f32 %v31, %v1580
  %v1586 = vadd.f32 %v32, %v1581
  %v1587 = vadd.f32 %v33, %v1582
  %v1588 = vperm.slane %v38, 0
  %v1589 = vadd.f32 %v1583, %v1588
  %v1590 = vadd.f32 %v1584, %v1588
  %v1591 = vadd.f32 %v1585, %v1588
  %v1592 = vadd.f32 %v1586, %v1588
  %v1593 = vadd.f32 %v1587, %v1588
  %v1594 = vsel %vm40, %v1589, 0.0
  %1595 = vadd.xlane.f32.xlu0 %v1594
  %v1596 = vpop.xlane.xlu0 %1595
  %v1597 = vsel %vm40, %v1590, 0.0
  %1598 = vadd.xlane.f32.xlu0 %v1597
  %v1599 = vpop.xlane.xlu0 %1598
  %v1600 = vsel %vm40, %v1591, 0.0
  %1601 = vadd.xlane.f32.xlu0 %v1600
  %v1602 = vpop.xlane.xlu0 %1601
  %v1603 = vsel %vm40, %v1592, 0.0
  %1604 = vadd.xlane.f32.xlu0 %v1603
  %v1605 = vpop.xlane.xlu0 %1604
  %v1606 = vsel %vm53, %v1593, 0.0
  %1607 = vadd.xlane.f32.xlu0 %v1606
  %v1608 = vpop.xlane.xlu0 %1607
  %v1609 = vmul.f32 %v1596, %v63
  %v1610 = vmul.f32 %v1599, %v63
  %v1611 = vmul.f32 %v1602, %v63
  %v1612 = vmul.f32 %v1605, %v63
  %v1613 = vmul.f32 %v1608, %v63
  %v1614 = vsub.f32 %v1589, %v1609
  %v1615 = vsub.f32 %v1590, %v1610
  %v1616 = vsub.f32 %v1591, %v1611
  %v1617 = vsub.f32 %v1592, %v1612
  %v1618 = vsub.f32 %v1593, %v1613
  %v1619 = vmul.f32 %v1614, %v1614
  %v1620 = vmul.f32 %v1615, %v1615
  %v1621 = vmul.f32 %v1616, %v1616
  %v1622 = vmul.f32 %v1617, %v1617
  %v1623 = vmul.f32 %v1618, %v1618
  %v1624 = vsel %vm40, %v1619, 0.0
  %1625 = vadd.xlane.f32.xlu0 %v1624
  %v1626 = vpop.xlane.xlu0 %1625
  %v1627 = vsel %vm40, %v1620, 0.0
  %1628 = vadd.xlane.f32.xlu0 %v1627
  %v1629 = vpop.xlane.xlu0 %1628
  %v1630 = vsel %vm40, %v1621, 0.0
  %1631 = vadd.xlane.f32.xlu0 %v1630
  %v1632 = vpop.xlane.xlu0 %1631
  %v1633 = vsel %vm40, %v1622, 0.0
  %1634 = vadd.xlane.f32.xlu0 %v1633
  %v1635 = vpop.xlane.xlu0 %1634
  %v1636 = vsel %vm53, %v1623, 0.0
  %1637 = vadd.xlane.f32.xlu0 %v1636
  %v1638 = vpop.xlane.xlu0 %1637
  %v1639 = vmul.f32 %v1626, %v63
  %v1640 = vmul.f32 %v1629, %v63
  %v1641 = vmul.f32 %v1632, %v63
  %v1642 = vmul.f32 %v1635, %v63
  %v1643 = vmul.f32 %v1638, %v63
  %v1644 = vadd.f32 %v1639, 1e-05
  %v1645 = vadd.f32 %v1640, 1e-05
  %v1646 = vadd.f32 %v1641, 1e-05
  %v1647 = vadd.f32 %v1642, 1e-05
  %v1648 = vadd.f32 %v1643, 1e-05
  %v1649 = vrsqrt.pop %v1644
  %v1650 = vmul.f32 %v1649, %v1644
  %v1651 = vmul.f32 %v1650, %v1649
  %v1652 = vmul.f32 0.5, %v1651
  %v1653 = vsub.f32 1.5, %v1652
  %v1654 = vmul.f32 %v1649, %v1653
  %vm1655 = vweird.f32 %v1644
  %vm1656 = vweird.f32 %v1649
  %vm1657 = vmor %vm1655, %vm1656
  %v1658 = vsel %vm1657, %v1649, %v1654
  %v1659 = vrsqrt.pop %v1645
  %v1660 = vmul.f32 %v1659, %v1645
  %v1661 = vmul.f32 %v1660, %v1659
  %v1662 = vmul.f32 0.5, %v1661
  %v1663 = vsub.f32 1.5, %v1662
  %v1664 = vmul.f32 %v1659, %v1663
  %vm1665 = vweird.f32 %v1645
  %vm1666 = vweird.f32 %v1659
  %vm1667 = vmor %vm1665, %vm1666
  %v1668 = vsel %vm1667, %v1659, %v1664
  %v1669 = vrsqrt.pop %v1646
  %v1670 = vmul.f32 %v1669, %v1646
  %v1671 = vmul.f32 %v1670, %v1669
  %v1672 = vmul.f32 0.5, %v1671
  %v1673 = vsub.f32 1.5, %v1672
  %v1674 = vmul.f32 %v1669, %v1673
  %vm1675 = vweird.f32 %v1646
  %vm1676 = vweird.f32 %v1669
  %vm1677 = vmor %vm1675, %vm1676
  %v1678 = vsel %vm1677, %v1669, %v1674
  %v1679 = vrsqrt.pop %v1647
  %v1680 = vmul.f32 %v1679, %v1647
  %v1681 = vmul.f32 %v1680, %v1679
  %v1682 = vmul.f32 0.5, %v1681
  %v1683 = vsub.f32 1.5, %v1682
  %v1684 = vmul.f32 %v1679, %v1683
  %vm1685 = vweird.f32 %v1647
  %vm1686 = vweird.f32 %v1679
  %vm1687 = vmor %vm1685, %vm1686
  %v1688 = vsel %vm1687, %v1679, %v1684
  %v1689 = vrsqrt.pop %v1648
  %v1690 = vmul.f32 %v1689, %v1648
  %v1691 = vmul.f32 %v1690, %v1689
  %v1692 = vmul.f32 0.5, %v1691
  %v1693 = vsub.f32 1.5, %v1692
  %v1694 = vmul.f32 %v1689, %v1693
  %vm1695 = vweird.f32 %v1648
  %vm1696 = vweird.f32 %v1689
  %vm1697 = vmor %vm1695, %vm1696
  %v1698 = vsel %vm1697, %v1689, %v1694
  %v1699 = vmul.f32 %v1614, %v1658
  %v1700 = vmul.f32 %v1615, %v1668
  %v1701 = vmul.f32 %v1616, %v1678
  %v1702 = vmul.f32 %v1617, %v1688
  %v1703 = vmul.f32 %v1618, %v1698
  %v1704 = vperm.slane %v36, 0
  %v1705 = vmul.f32 %v1699, %v1704
  %v1706 = vmul.f32 %v1700, %v1704
  %v1707 = vmul.f32 %v1701, %v1704
  %v1708 = vmul.f32 %v1702, %v1704
  %v1709 = vmul.f32 %v1703, %v1704
  %v1710 = vperm.slane %v37, 0
  %v1711 = vadd.f32 %v1705, %v1710
  %v1712 = vadd.f32 %v1706, %v1710
  %v1713 = vadd.f32 %v1707, %v1710
  %v1714 = vadd.f32 %v1708, %v1710
  %v1715 = vadd.f32 %v1709, %v1710
  %v1716 = vld [vmem:[%s5] sm:$0xff]
  %v1717 = vld [vmem:[%s5 + $0x8] sm:$0xff]
  %v1718 = vld [vmem:[%s5 + $0x10] sm:$0xff]
  %v1719 = vld [vmem:[%s5 + $0x18] sm:$0xff]
  %v1720 = vld [vmem:[%s6] sm:$0x1]
  %v1722 = vperm.slane %v1720, 0
  %v1725 = vsel %vm40, %v1711, 0
  %v1728 = vsel %vm40, %v1712, 0
  %v1731 = vsel %vm40, %v1713, 0
  %v1734 = vsel %vm40, %v1714, 0
  %v1737 = vsel %vm40, %v1715, 0
  %1739 = vmatpush.msra.mxu0 0.0
  %1740 = vmatpush.msra.mxu0 0.0
  %1741 = vmatpush.msra.mxu0 0.0
  %1742 = vmatpush.msra.mxu0 0.0
  %1743 = vmatpush.msra.mxu0 0.0
  %1744 = vmatpush.msra.mxu0 0.0
  %1745 = vmatpush.msra.mxu0 0.0
  %1746 = vmatpush.msra.mxu0 0.0
  %1747 = vmatpush.msra.mxu0 0.0
  %1748 = vmatpush.msra.mxu0 0.0
  %1749 = vmatpush.msra.mxu0 0.0
  %1750 = vmatpush.msra.mxu0 0.0
  %1751 = vmatpush.msra.mxu0 %v1719
  %1752 = vmatpush.msra.mxu0 %v1718
  %1753 = vmatpush.msra.mxu0 %v1717
  %1754 = vmatpush.msra.mxu0 %v1716
  %1755 = vmatmul.f32.gmra.mxu0 %v1725
  %v1756 = vpop.f32.mrf.mxu0
  %v1757 = vadd.f32 %v1722, %v1756
  %1758 = vmatmul.f32.gmra.mxu0 %v1728
  %v1759 = vpop.f32.mrf.mxu0
  %v1760 = vadd.f32 %v1722, %v1759
  %1761 = vmatmul.f32.gmra.mxu0 %v1731
  %v1762 = vpop.f32.mrf.mxu0
  %v1763 = vadd.f32 %v1722, %v1762
  %1764 = vmatmul.f32.gmra.mxu0 %v1734
  %v1765 = vpop.f32.mrf.mxu0
  %v1766 = vadd.f32 %v1722, %v1765
  %1767 = vmatmul.f32.gmra.mxu0 %v1737
  %v1768 = vpop.f32.mrf.mxu0
  %v1769 = vadd.f32 %v1722, %v1768
  %1770 = vdwg.mxu0
  %v1771 = vmul.f32 %v1757, 1.702
  %v1772 = vmul.f32 %v1760, 1.702
  %v1773 = vmul.f32 %v1763, 1.702
  %v1774 = vmul.f32 %v1766, 1.702
  %v1775 = vmul.f32 %v1769, 1.702
  %v1776 = vxor.u32 %v1771, 2147483648
  %v1777 = vxor.u32 %v1772, 2147483648
  %v1778 = vxor.u32 %v1773, 2147483648
  %v1779 = vxor.u32 %v1774, 2147483648
  %v1780 = vxor.u32 %v1775, 2147483648
  %v1781 = vmul.f32 %v1776, 1.442695
  %v1782 = vpow.pop %v1781
  %v1783 = vmul.f32 %v1777, 1.442695
  %v1784 = vpow.pop %v1783
  %v1785 = vmul.f32 %v1778, 1.442695
  %v1786 = vpow.pop %v1785
  %v1787 = vmul.f32 %v1779, 1.442695
  %v1788 = vpow.pop %v1787
  %v1789 = vmul.f32 %v1780, 1.442695
  %v1790 = vpow.pop %v1789
  %v1791 = vadd.f32 %v1782, 1.0
  %v1792 = vadd.f32 %v1784, 1.0
  %v1793 = vadd.f32 %v1786, 1.0
  %v1794 = vadd.f32 %v1788, 1.0
  %v1795 = vadd.f32 %v1790, 1.0
  %v1796 = vrcp.pop %v1791
  %v1797 = vmul.f32 %v1791, %v1796
  %v1798 = vsub.f32 1.0, %v1797
  %v1799 = vmul.f32 %v1796, %v1798
  %v1800 = vadd.f32 %v1796, %v1799
  %vm1801 = vweird.f32 %v1791
  %vm1802 = vweird.f32 %v1796
  %vm1803 = vmor %vm1801, %vm1802
  %v1804 = vsel %vm1803, %v1796, %v1800
  %v1805 = vand.u32 2147483647, %v1791
  %vm1806 = vcmp.eq.f32.partialorder %v1805, 8.507059e+37
  %v1807 = vand.u32 %v1791, 2147483648
  %v1808 = vor.u32 1.1754944e-38, %v1807
  %v1809 = vsel %vm1806, %v1808, %v1804
  %v1810 = vmul.f32 1.0, %v1809
  %v1811 = vrcp.pop %v1792
  %v1812 = vmul.f32 %v1792, %v1811
  %v1813 = vsub.f32 1.0, %v1812
  %v1814 = vmul.f32 %v1811, %v1813
  %v1815 = vadd.f32 %v1811, %v1814
  %vm1816 = vweird.f32 %v1792
  %vm1817 = vweird.f32 %v1811
  %vm1818 = vmor %vm1816, %vm1817
  %v1819 = vsel %vm1818, %v1811, %v1815
  %v1820 = vand.u32 2147483647, %v1792
  %vm1821 = vcmp.eq.f32.partialorder %v1820, 8.507059e+37
  %v1822 = vand.u32 %v1792, 2147483648
  %v1823 = vor.u32 1.1754944e-38, %v1822
  %v1824 = vsel %vm1821, %v1823, %v1819
  %v1825 = vmul.f32 1.0, %v1824
  %v1826 = vrcp.pop %v1793
  %v1827 = vmul.f32 %v1793, %v1826
  %v1828 = vsub.f32 1.0, %v1827
  %v1829 = vmul.f32 %v1826, %v1828
  %v1830 = vadd.f32 %v1826, %v1829
  %vm1831 = vweird.f32 %v1793
  %vm1832 = vweird.f32 %v1826
  %vm1833 = vmor %vm1831, %vm1832
  %v1834 = vsel %vm1833, %v1826, %v1830
  %v1835 = vand.u32 2147483647, %v1793
  %vm1836 = vcmp.eq.f32.partialorder %v1835, 8.507059e+37
  %v1837 = vand.u32 %v1793, 2147483648
  %v1838 = vor.u32 1.1754944e-38, %v1837
  %v1839 = vsel %vm1836, %v1838, %v1834
  %v1840 = vmul.f32 1.0, %v1839
  %v1841 = vrcp.pop %v1794
  %v1842 = vmul.f32 %v1794, %v1841
  %v1843 = vsub.f32 1.0, %v1842
  %v1844 = vmul.f32 %v1841, %v1843
  %v1845 = vadd.f32 %v1841, %v1844
  %vm1846 = vweird.f32 %v1794
  %vm1847 = vweird.f32 %v1841
  %vm1848 = vmor %vm1846, %vm1847
  %v1849 = vsel %vm1848, %v1841, %v1845
  %v1850 = vand.u32 2147483647, %v1794
  %vm1851 = vcmp.eq.f32.partialorder %v1850, 8.507059e+37
  %v1852 = vand.u32 %v1794, 2147483648
  %v1853 = vor.u32 1.1754944e-38, %v1852
  %v1854 = vsel %vm1851, %v1853, %v1849
  %v1855 = vmul.f32 1.0, %v1854
  %v1856 = vrcp.pop %v1795
  %v1857 = vmul.f32 %v1795, %v1856
  %v1858 = vsub.f32 1.0, %v1857
  %v1859 = vmul.f32 %v1856, %v1858
  %v1860 = vadd.f32 %v1856, %v1859
  %vm1861 = vweird.f32 %v1795
  %vm1862 = vweird.f32 %v1856
  %vm1863 = vmor %vm1861, %vm1862
  %v1864 = vsel %vm1863, %v1856, %v1860
  %v1865 = vand.u32 2147483647, %v1795
  %vm1866 = vcmp.eq.f32.partialorder %v1865, 8.507059e+37
  %v1867 = vand.u32 %v1795, 2147483648
  %v1868 = vor.u32 1.1754944e-38, %v1867
  %v1869 = vsel %vm1866, %v1868, %v1864
  %v1870 = vmul.f32 1.0, %v1869
  %v1871 = vmul.f32 %v1757, %v1810
  %v1872 = vmul.f32 %v1760, %v1825
  %v1873 = vmul.f32 %v1763, %v1840
  %v1874 = vmul.f32 %v1766, %v1855
  %v1875 = vmul.f32 %v1769, %v1870
  %v1876 = vld [vmem:[%s7] sm:$0xff]
  %v1877 = vld [vmem:[%s7 + $0x8] sm:$0xff]
  %v1878 = vld [vmem:[%s7 + $0x10] sm:$0xff]
  %v1879 = vld [vmem:[%s7 + $0x18] sm:$0xff]
  %v1880 = vld [vmem:[%s7 + $0x20] sm:$0xff]
  %v1881 = vld [vmem:[%s7 + $0x28] sm:$0xff]
  %v1882 = vld [vmem:[%s7 + $0x30] sm:$0xff]
  %v1883 = vld [vmem:[%s7 + $0x38] sm:$0xff]
  %v1884 = vld [vmem:[%s7 + $0x40] sm:$0xff]
  %v1885 = vld [vmem:[%s7 + $0x48] sm:$0xff]
  %v1886 = vld [vmem:[%s7 + $0x50] sm:$0xff]
  %v1887 = vld [vmem:[%s7 + $0x58] sm:$0xff]
  %v1888 = vld [vmem:[%s7 + $0x60] sm:$0xff]
  %v1889 = vld [vmem:[%s7 + $0x68] sm:$0xff]
  %v1890 = vld [vmem:[%s7 + $0x70] sm:$0xff]
  %v1891 = vld [vmem:[%s7 + $0x78] sm:$0xff]
  %v1892 = vperm.slane %v39, 0
  %1893 = vmatpush.msra.mxu0 %v1891
  %1894 = vmatpush.msra.mxu0 %v1890
  %1895 = vmatpush.msra.mxu0 %v1889
  %1896 = vmatpush.msra.mxu0 %v1888
  %1897 = vmatpush.msra.mxu0 %v1887
  %1898 = vmatpush.msra.mxu0 %v1886
  %1899 = vmatpush.msra.mxu0 %v1885
  %1900 = vmatpush.msra.mxu0 %v1884
  %1901 = vmatpush.msra.mxu0 %v1883
  %1902 = vmatpush.msra.mxu0 %v1882
  %1903 = vmatpush.msra.mxu0 %v1881
  %1904 = vmatpush.msra.mxu0 %v1880
  %1905 = vmatpush.msra.mxu0 %v1879
  %1906 = vmatpush.msra.mxu0 %v1878
  %1907 = vmatpush.msra.mxu0 %v1877
  %1908 = vmatpush.msra.mxu0 %v1876
  %1909 = vmatmul.f32.gmra.mxu0 %v1871
  %v1910 = vpop.f32.mrf.mxu0
  %v1911 = vadd.f32 %v1892, %v1910
  %1912 = vmatmul.f32.gmra.mxu0 %v1872
  %v1913 = vpop.f32.mrf.mxu0
  %v1914 = vadd.f32 %v1892, %v1913
  %1915 = vmatmul.f32.gmra.mxu0 %v1873
  %v1916 = vpop.f32.mrf.mxu0
  %v1917 = vadd.f32 %v1892, %v1916
  %1918 = vmatmul.f32.gmra.mxu0 %v1874
  %v1919 = vpop.f32.mrf.mxu0
  %v1920 = vadd.f32 %v1892, %v1919
  %1921 = vmatmul.f32.gmra.mxu0 %v1875
  %v1922 = vpop.f32.mrf.mxu0
  %v1923 = vadd.f32 %v1892, %v1922
  %1924 = vdwg.mxu0
  %v1925 = vadd.f32 %v1589, %v1911
  %v1926 = vadd.f32 %v1590, %v1914
  %v1927 = vadd.f32 %v1591, %v1917
  %v1928 = vadd.f32 %v1592, %v1920
  %v1929 = vadd.f32 %v1593, %v1923
  %1930 = vst.msk [vmem:[%s8] sm:$0xff] %vm40, %v1925
  %1931 = vst.msk [vmem:[%s8 + $0x8] sm:$0xff] %vm40, %v1926
  %1932 = vst.msk [vmem:[%s8 + $0x10] sm:$0xff] %vm40, %v1927
  %1933 = vst.msk [vmem:[%s8 + $0x18] sm:$0xff] %vm40, %v1928
  %1934 = vst.msk [vmem:[%s8 + $0x20] sm:$0x3] %vm53, %v1929
  // Predicated region
  $region34: #{tpu_custom_call.1} parent=0 // pred_check
    _
  $region35: #{tpu_custom_call.1} parent=0 // pred_check_branch
    %1936 = sbr.rel (0) target = $region37
  $region36: #{tpu_custom_call.1} parent=0 // pred_region
    _
  $region37: #{tpu_custom_call.1} parent=0 // pred_fallthru
    _
  // Predicated region
  $region38: #{tpu_custom_call.1} parent=0 // pred_check
    _
  $region39: #{tpu_custom_call.1} parent=0 // pred_check_branch
    %1938 = sbr.rel (0) target = $region41
  $region40: #{tpu_custom_call.1} parent=0 // pred_region
    _
  $region41: #{tpu_custom_call.1} parent=0 // pred_fallthru
    _

</llo_original>
